<compile_context>
chip_gen: v6e
topology: v6e:2x2x1
jax: 0.10.0
libtpu: 0.0.40
codegen_flags: <defaults>
</compile_context>

<pallas_src>
import jax
import jax.numpy as jnp
from jax import lax
from jax.experimental import pallas as pl
from jax.experimental.pallas import tpu as pltpu

DIM = 64                       # channel dim of the block (Conv2d in/out channels)
HEADS = 4                      # LinearAttention default
DIM_HEAD = 32                  # LinearAttention default
HIDDEN = HEADS * DIM_HEAD      # 128
SCALE = DIM_HEAD ** -0.5
EPS = 1e-12                    # F.normalize default eps


# ----------------------------- parameters ------------------------------------

def init_params(key, dim=DIM, heads=HEADS, dim_head=DIM_HEAD):
    """Deterministic synthetic parameters in conv-weight (out_ch, in_ch) layout."""
    hid = heads * dim_head
    k1, k2, k3, k4 = jax.random.split(key, 4)
    w_qkv = jax.random.normal(k1, (3 * hid, dim), jnp.float32) * (dim ** -0.5)
    w_out = jax.random.normal(k2, (dim, hid), jnp.float32) * (hid ** -0.5)
    b_out = jax.random.normal(k3, (dim, 1), jnp.float32) * 0.01
    g = 1.0 + 0.1 * jax.random.normal(k4, (dim, 1), jnp.float32)   # RMSNorm gain
    return w_qkv, w_out, b_out, g


# ----------------------------- Pallas kernel ---------------------------------

def _linear_attention_kernel(x_ref, wqkv_ref, wout_ref, bout_ref, g_ref, o_ref):
    # x:    [C, N]  (one batch element, channels-first, N = H*W on lanes)
    # wqkv: [3*HIDDEN, C]   wout: [C, HIDDEN]   bout, g: [C, 1]   o: [C, N]
    x = x_ref[...]
    c = x.shape[0]

    # to_qkv: 1x1 conv, no bias -> single lane-dense GEMM for the whole block.
    qkv = jnp.dot(wqkv_ref[...], x, preferred_element_type=jnp.float32)   # [3H, N]

    outs = []
    for h in range(HEADS):
        q = qkv[h * DIM_HEAD:(h + 1) * DIM_HEAD, :]                        # [d, N]
        k = qkv[HIDDEN + h * DIM_HEAD:HIDDEN + (h + 1) * DIM_HEAD, :]      # [d, N]
        v = qkv[2 * HIDDEN + h * DIM_HEAD:2 * HIDDEN + (h + 1) * DIM_HEAD, :]

        # q: softmax over the head dim (rows / sublanes), then * scale.
        q = jnp.exp(q - jnp.max(q, axis=0, keepdims=True))
        q = q / jnp.sum(q, axis=0, keepdims=True)
        q = q * SCALE

        # k: softmax over the spatial dim (columns / lanes).
        k = jnp.exp(k - jnp.max(k, axis=1, keepdims=True))
        k = k / jnp.sum(k, axis=1, keepdims=True)

        # context[d, e] = sum_n k[d, n] * v[e, n]   (NT matmul on the MXU)
        context = lax.dot_general(k, v, (((1,), (1,)), ((), ())),
                                  preferred_element_type=jnp.float32)      # [d, e]
        # out[e, n] = sum_d context[d, e] * q[d, n]
        out_h = jnp.dot(context.T, q, preferred_element_type=jnp.float32)  # [e, N]
        outs.append(out_h)

    out_all = jnp.concatenate(outs, axis=0)                                # [HIDDEN, N]

    # to_out: 1x1 conv with bias, then RMSNorm over channels per pixel.
    y = jnp.dot(wout_ref[...], out_all, preferred_element_type=jnp.float32)  # [C, N]
    y = y + bout_ref[...]
    norm = jnp.sqrt(jnp.sum(y * y, axis=0, keepdims=True))                 # [1, N]
    y = y / jnp.maximum(norm, EPS)                                         # F.normalize(dim=1)
    o_ref[...] = y * g_ref[...] * (c ** 0.5)


def linear_attention_forward(x_nchw, params):
    """LinearAttention.forward, NCHW in / NCHW out."""
    w_qkv, w_out, b_out, g = params
    B, C, H, W = x_nchw.shape
    assert C == DIM and w_qkv.shape == (3 * HIDDEN, C)
    N = H * W
    x_flat = x_nchw.reshape(B, C, N).astype(jnp.float32)

    out = pl.pallas_call(
        _linear_attention_kernel,
        out_shape=jax.ShapeDtypeStruct((B, C, N), jnp.float32),
        grid=(B,),
        in_specs=[
            pl.BlockSpec((None, C, N), lambda b: (b, 0, 0)),        # x (per batch)
            pl.BlockSpec((3 * HIDDEN, C), lambda b: (0, 0)),        # to_qkv weight
            pl.BlockSpec((C, HIDDEN), lambda b: (0, 0)),            # to_out weight
            pl.BlockSpec((C, 1), lambda b: (0, 0)),                 # to_out bias
            pl.BlockSpec((C, 1), lambda b: (0, 0)),                 # RMSNorm gain
        ],
        out_specs=pl.BlockSpec((None, C, N), lambda b: (b, 0, 0)),
        compiler_params=pltpu.CompilerParams(
            dimension_semantics=("parallel",)),                     # v7x: 2 TCs split batch
    )(x_flat, w_qkv, w_out, b_out, g)
    return out.reshape(B, C, H, W)


# ----------------------------- pure-JAX reference -----------------------------

def reference_forward(x_nchw, params, heads=HEADS, dim_head=DIM_HEAD):
    """Mirrors the PyTorch LinearAttention.forward exactly (for correctness check)."""
    w_qkv, w_out, b_out, g = params
    B, C, H, W = x_nchw.shape
    N = H * W
    hid = heads * dim_head
    scale = dim_head ** -0.5

    x = x_nchw.reshape(B, C, N).astype(jnp.float32)
    qkv = jnp.einsum("oc,bcn->bon", w_qkv, x)                       # [B, 3*hid, N]
    q, k, v = jnp.split(qkv, 3, axis=1)
    q = q.reshape(B, heads, dim_head, N)
    k = k.reshape(B, heads, dim_head, N)
    v = v.reshape(B, heads, dim_head, N)

    q = jax.nn.softmax(q, axis=-2)
    k = jax.nn.softmax(k, axis=-1)
    q = q * scale
    context = jnp.einsum("bhdn,bhen->bhde", k, v)
    out = jnp.einsum("bhde,bhdn->bhen", context, q).reshape(B, hid, N)

    y = jnp.einsum("oc,bcn->bon", w_out, out) + b_out[None, :, :]
    norm = jnp.sqrt(jnp.sum(y * y, axis=1, keepdims=True))
    y = y / jnp.maximum(norm, EPS) * g[None, :, :] * (C ** 0.5)
    return y.reshape(B, C, H, W)


if __name__ == "__main__":
    key = jax.random.PRNGKey(0)
    k_x, k_p = jax.random.split(key)

    B, H, W = 2, 16, 16                                   # N = H*W = 256 (lane-dense)
    x = jax.random.normal(k_x, (B, DIM, H, W), jnp.float32)   # NCHW input (PyTorch)
    params = init_params(k_p)

    out = linear_attention_forward(x, params)
    out = jax.block_until_ready(out)

    ref = reference_forward(x, params)
    assert out.shape == (B, DIM, H, W), out.shape
    assert jnp.allclose(out, ref, atol=1e-3, rtol=1e-3), "mismatch vs reference"

    print("KERNEL_OK")
</pallas_src>

<mosaic_0001>
module attributes {stable_mosaic.version = 11 : i64} {
  func.func @_linear_attention_kernel(%arg0: i32, %arg1: memref<1x64x256xf32, #tpu.memory_space<vmem>>, %arg2: memref<384x64xf32, #tpu.memory_space<vmem>>, %arg3: memref<64x128xf32, #tpu.memory_space<vmem>>, %arg4: memref<64x1xf32, #tpu.memory_space<vmem>>, %arg5: memref<64x1xf32, #tpu.memory_space<vmem>>, %arg6: memref<1x64x256xf32, #tpu.memory_space<vmem>>) attributes {dimension_semantics = [#tpu.dimension_semantics<parallel>], iteration_bounds = array<i64: 2>, scalar_prefetch = 0 : i64, scratch_operands = 0 : i64, tpu.core_type = #tpu.core_type<tc>, window_params = [{transform_indices = @transform_0, window_bounds = array<i64: 1, 64, 256>}, {pipeline_mode = #tpu.pipeline_mode<synchronous>, transform_indices = @transform_1, window_bounds = array<i64: 384, 64>}, {pipeline_mode = #tpu.pipeline_mode<synchronous>, transform_indices = @transform_2, window_bounds = array<i64: 64, 128>}, {pipeline_mode = #tpu.pipeline_mode<synchronous>, transform_indices = @transform_3, window_bounds = array<i64: 64, 1>}, {pipeline_mode = #tpu.pipeline_mode<synchronous>, transform_indices = @transform_4, window_bounds = array<i64: 64, 1>}, {transform_indices = @transform_5, window_bounds = array<i64: 1, 64, 256>}]} {
    %c0 = arith.constant 0 : index
    %c0_0 = arith.constant 0 : index
    %c0_1 = arith.constant 0 : index
    %0 = vector.load %arg1[%c0, %c0_0, %c0_1] : memref<1x64x256xf32, #tpu.memory_space<vmem>>, vector<1x64x256xf32>
    %1 = vector.shape_cast %0 : vector<1x64x256xf32> to vector<64x256xf32>
    %c0_2 = arith.constant 0 : index
    %c0_3 = arith.constant 0 : index
    %2 = vector.load %arg2[%c0_2, %c0_3] : memref<384x64xf32, #tpu.memory_space<vmem>>, vector<384x64xf32>
    %cst = arith.constant dense<0.000000e+00> : vector<384x256xf32>
    %3 = tpu.matmul %2, %1, %cst {dimension_numbers = #tpu.dot_dimension_numbers<[1], [0], [0], [1], [0, 0, 1, 1], [], []>} : vector<384x64xf32>, vector<64x256xf32>, vector<384x256xf32> -> vector<384x256xf32>
    %4 = vector.extract_strided_slice %3 {offsets = [0, 0], sizes = [32, 256], strides = [1, 1]} : vector<384x256xf32> to vector<32x256xf32>
    %5 = vector.extract_strided_slice %3 {offsets = [128, 0], sizes = [32, 256], strides = [1, 1]} : vector<384x256xf32> to vector<32x256xf32>
    %6 = vector.extract_strided_slice %3 {offsets = [256, 0], sizes = [32, 256], strides = [1, 1]} : vector<384x256xf32> to vector<32x256xf32>
    %cst_4 = arith.constant dense<0xFF800000> : vector<256xf32>
    %7 = vector.multi_reduction <maximumf>, %4, %cst_4 [0] : vector<32x256xf32> to vector<256xf32>
    %8 = vector.shape_cast %7 : vector<256xf32> to vector<1x256xf32>
    %9 = vector.broadcast %8 : vector<1x256xf32> to vector<32x256xf32>
    %10 = arith.subf %4, %9 : vector<32x256xf32>
    %11 = math.exp %10 : vector<32x256xf32>
    %cst_5 = arith.constant dense<0.000000e+00> : vector<256xf32>
    %12 = vector.multi_reduction <add>, %11, %cst_5 [0] : vector<32x256xf32> to vector<256xf32>
    %13 = vector.shape_cast %12 : vector<256xf32> to vector<1x256xf32>
    %14 = vector.broadcast %13 : vector<1x256xf32> to vector<32x256xf32>
    %15 = arith.divf %11, %14 : vector<32x256xf32>
    %cst_6 = arith.constant 0.176776692 : f32
    %16 = vector.broadcast %cst_6 : f32 to vector<32x256xf32>
    %17 = arith.mulf %15, %16 : vector<32x256xf32>
    %cst_7 = arith.constant dense<0xFF800000> : vector<32xf32>
    %18 = vector.multi_reduction <maximumf>, %5, %cst_7 [1] : vector<32x256xf32> to vector<32xf32>
    %19 = vector.shape_cast %18 : vector<32xf32> to vector<32x1xf32>
    %20 = vector.broadcast %19 : vector<32x1xf32> to vector<32x256xf32>
    %21 = arith.subf %5, %20 : vector<32x256xf32>
    %22 = math.exp %21 : vector<32x256xf32>
    %cst_8 = arith.constant dense<0.000000e+00> : vector<32xf32>
    %23 = vector.multi_reduction <add>, %22, %cst_8 [1] : vector<32x256xf32> to vector<32xf32>
    %24 = vector.shape_cast %23 : vector<32xf32> to vector<32x1xf32>
    %25 = vector.broadcast %24 : vector<32x1xf32> to vector<32x256xf32>
    %26 = arith.divf %22, %25 : vector<32x256xf32>
    %cst_9 = arith.constant dense<0.000000e+00> : vector<32x32xf32>
    %27 = tpu.matmul %26, %6, %cst_9 {dimension_numbers = #tpu.dot_dimension_numbers<[1], [1], [0], [0], [0, 0, 1, 0], [], []>} : vector<32x256xf32>, vector<32x256xf32>, vector<32x32xf32> -> vector<32x32xf32>
    %28 = tpu.transpose %27, [1, 0] : vector<32x32xf32> -> vector<32x32xf32>
    %cst_10 = arith.constant dense<0.000000e+00> : vector<32x256xf32>
    %29 = tpu.matmul %28, %17, %cst_10 {dimension_numbers = #tpu.dot_dimension_numbers<[1], [0], [0], [1], [0, 0, 1, 1], [], []>} : vector<32x32xf32>, vector<32x256xf32>, vector<32x256xf32> -> vector<32x256xf32>
    %30 = vector.extract_strided_slice %3 {offsets = [32, 0], sizes = [32, 256], strides = [1, 1]} : vector<384x256xf32> to vector<32x256xf32>
    %31 = vector.extract_strided_slice %3 {offsets = [160, 0], sizes = [32, 256], strides = [1, 1]} : vector<384x256xf32> to vector<32x256xf32>
    %32 = vector.extract_strided_slice %3 {offsets = [288, 0], sizes = [32, 256], strides = [1, 1]} : vector<384x256xf32> to vector<32x256xf32>
    %cst_11 = arith.constant dense<0xFF800000> : vector<256xf32>
    %33 = vector.multi_reduction <maximumf>, %30, %cst_11 [0] : vector<32x256xf32> to vector<256xf32>
    %34 = vector.shape_cast %33 : vector<256xf32> to vector<1x256xf32>
    %35 = vector.broadcast %34 : vector<1x256xf32> to vector<32x256xf32>
    %36 = arith.subf %30, %35 : vector<32x256xf32>
    %37 = math.exp %36 : vector<32x256xf32>
    %cst_12 = arith.constant dense<0.000000e+00> : vector<256xf32>
    %38 = vector.multi_reduction <add>, %37, %cst_12 [0] : vector<32x256xf32> to vector<256xf32>
    %39 = vector.shape_cast %38 : vector<256xf32> to vector<1x256xf32>
    %40 = vector.broadcast %39 : vector<1x256xf32> to vector<32x256xf32>
    %41 = arith.divf %37, %40 : vector<32x256xf32>
    %cst_13 = arith.constant 0.176776692 : f32
    %42 = vector.broadcast %cst_13 : f32 to vector<32x256xf32>
    %43 = arith.mulf %41, %42 : vector<32x256xf32>
    %cst_14 = arith.constant dense<0xFF800000> : vector<32xf32>
    %44 = vector.multi_reduction <maximumf>, %31, %cst_14 [1] : vector<32x256xf32> to vector<32xf32>
    %45 = vector.shape_cast %44 : vector<32xf32> to vector<32x1xf32>
    %46 = vector.broadcast %45 : vector<32x1xf32> to vector<32x256xf32>
    %47 = arith.subf %31, %46 : vector<32x256xf32>
    %48 = math.exp %47 : vector<32x256xf32>
    %cst_15 = arith.constant dense<0.000000e+00> : vector<32xf32>
    %49 = vector.multi_reduction <add>, %48, %cst_15 [1] : vector<32x256xf32> to vector<32xf32>
    %50 = vector.shape_cast %49 : vector<32xf32> to vector<32x1xf32>
    %51 = vector.broadcast %50 : vector<32x1xf32> to vector<32x256xf32>
    %52 = arith.divf %48, %51 : vector<32x256xf32>
    %cst_16 = arith.constant dense<0.000000e+00> : vector<32x32xf32>
    %53 = tpu.matmul %52, %32, %cst_16 {dimension_numbers = #tpu.dot_dimension_numbers<[1], [1], [0], [0], [0, 0, 1, 0], [], []>} : vector<32x256xf32>, vector<32x256xf32>, vector<32x32xf32> -> vector<32x32xf32>
    %54 = tpu.transpose %53, [1, 0] : vector<32x32xf32> -> vector<32x32xf32>
    %cst_17 = arith.constant dense<0.000000e+00> : vector<32x256xf32>
    %55 = tpu.matmul %54, %43, %cst_17 {dimension_numbers = #tpu.dot_dimension_numbers<[1], [0], [0], [1], [0, 0, 1, 1], [], []>} : vector<32x32xf32>, vector<32x256xf32>, vector<32x256xf32> -> vector<32x256xf32>
    %56 = vector.extract_strided_slice %3 {offsets = [64, 0], sizes = [32, 256], strides = [1, 1]} : vector<384x256xf32> to vector<32x256xf32>
    %57 = vector.extract_strided_slice %3 {offsets = [192, 0], sizes = [32, 256], strides = [1, 1]} : vector<384x256xf32> to vector<32x256xf32>
    %58 = vector.extract_strided_slice %3 {offsets = [320, 0], sizes = [32, 256], strides = [1, 1]} : vector<384x256xf32> to vector<32x256xf32>
    %cst_18 = arith.constant dense<0xFF800000> : vector<256xf32>
    %59 = vector.multi_reduction <maximumf>, %56, %cst_18 [0] : vector<32x256xf32> to vector<256xf32>
    %60 = vector.shape_cast %59 : vector<256xf32> to vector<1x256xf32>
    %61 = vector.broadcast %60 : vector<1x256xf32> to vector<32x256xf32>
    %62 = arith.subf %56, %61 : vector<32x256xf32>
    %63 = math.exp %62 : vector<32x256xf32>
    %cst_19 = arith.constant dense<0.000000e+00> : vector<256xf32>
    %64 = vector.multi_reduction <add>, %63, %cst_19 [0] : vector<32x256xf32> to vector<256xf32>
    %65 = vector.shape_cast %64 : vector<256xf32> to vector<1x256xf32>
    %66 = vector.broadcast %65 : vector<1x256xf32> to vector<32x256xf32>
    %67 = arith.divf %63, %66 : vector<32x256xf32>
    %cst_20 = arith.constant 0.176776692 : f32
    %68 = vector.broadcast %cst_20 : f32 to vector<32x256xf32>
    %69 = arith.mulf %67, %68 : vector<32x256xf32>
    %cst_21 = arith.constant dense<0xFF800000> : vector<32xf32>
    %70 = vector.multi_reduction <maximumf>, %57, %cst_21 [1] : vector<32x256xf32> to vector<32xf32>
    %71 = vector.shape_cast %70 : vector<32xf32> to vector<32x1xf32>
    %72 = vector.broadcast %71 : vector<32x1xf32> to vector<32x256xf32>
    %73 = arith.subf %57, %72 : vector<32x256xf32>
    %74 = math.exp %73 : vector<32x256xf32>
    %cst_22 = arith.constant dense<0.000000e+00> : vector<32xf32>
    %75 = vector.multi_reduction <add>, %74, %cst_22 [1] : vector<32x256xf32> to vector<32xf32>
    %76 = vector.shape_cast %75 : vector<32xf32> to vector<32x1xf32>
    %77 = vector.broadcast %76 : vector<32x1xf32> to vector<32x256xf32>
    %78 = arith.divf %74, %77 : vector<32x256xf32>
    %cst_23 = arith.constant dense<0.000000e+00> : vector<32x32xf32>
    %79 = tpu.matmul %78, %58, %cst_23 {dimension_numbers = #tpu.dot_dimension_numbers<[1], [1], [0], [0], [0, 0, 1, 0], [], []>} : vector<32x256xf32>, vector<32x256xf32>, vector<32x32xf32> -> vector<32x32xf32>
    %80 = tpu.transpose %79, [1, 0] : vector<32x32xf32> -> vector<32x32xf32>
    %cst_24 = arith.constant dense<0.000000e+00> : vector<32x256xf32>
    %81 = tpu.matmul %80, %69, %cst_24 {dimension_numbers = #tpu.dot_dimension_numbers<[1], [0], [0], [1], [0, 0, 1, 1], [], []>} : vector<32x32xf32>, vector<32x256xf32>, vector<32x256xf32> -> vector<32x256xf32>
    %82 = vector.extract_strided_slice %3 {offsets = [96, 0], sizes = [32, 256], strides = [1, 1]} : vector<384x256xf32> to vector<32x256xf32>
    %83 = vector.extract_strided_slice %3 {offsets = [224, 0], sizes = [32, 256], strides = [1, 1]} : vector<384x256xf32> to vector<32x256xf32>
    %84 = vector.extract_strided_slice %3 {offsets = [352, 0], sizes = [32, 256], strides = [1, 1]} : vector<384x256xf32> to vector<32x256xf32>
    %cst_25 = arith.constant dense<0xFF800000> : vector<256xf32>
    %85 = vector.multi_reduction <maximumf>, %82, %cst_25 [0] : vector<32x256xf32> to vector<256xf32>
    %86 = vector.shape_cast %85 : vector<256xf32> to vector<1x256xf32>
    %87 = vector.broadcast %86 : vector<1x256xf32> to vector<32x256xf32>
    %88 = arith.subf %82, %87 : vector<32x256xf32>
    %89 = math.exp %88 : vector<32x256xf32>
    %cst_26 = arith.constant dense<0.000000e+00> : vector<256xf32>
    %90 = vector.multi_reduction <add>, %89, %cst_26 [0] : vector<32x256xf32> to vector<256xf32>
    %91 = vector.shape_cast %90 : vector<256xf32> to vector<1x256xf32>
    %92 = vector.broadcast %91 : vector<1x256xf32> to vector<32x256xf32>
    %93 = arith.divf %89, %92 : vector<32x256xf32>
    %cst_27 = arith.constant 0.176776692 : f32
    %94 = vector.broadcast %cst_27 : f32 to vector<32x256xf32>
    %95 = arith.mulf %93, %94 : vector<32x256xf32>
    %cst_28 = arith.constant dense<0xFF800000> : vector<32xf32>
    %96 = vector.multi_reduction <maximumf>, %83, %cst_28 [1] : vector<32x256xf32> to vector<32xf32>
    %97 = vector.shape_cast %96 : vector<32xf32> to vector<32x1xf32>
    %98 = vector.broadcast %97 : vector<32x1xf32> to vector<32x256xf32>
    %99 = arith.subf %83, %98 : vector<32x256xf32>
    %100 = math.exp %99 : vector<32x256xf32>
    %cst_29 = arith.constant dense<0.000000e+00> : vector<32xf32>
    %101 = vector.multi_reduction <add>, %100, %cst_29 [1] : vector<32x256xf32> to vector<32xf32>
    %102 = vector.shape_cast %101 : vector<32xf32> to vector<32x1xf32>
    %103 = vector.broadcast %102 : vector<32x1xf32> to vector<32x256xf32>
    %104 = arith.divf %100, %103 : vector<32x256xf32>
    %cst_30 = arith.constant dense<0.000000e+00> : vector<32x32xf32>
    %105 = tpu.matmul %104, %84, %cst_30 {dimension_numbers = #tpu.dot_dimension_numbers<[1], [1], [0], [0], [0, 0, 1, 0], [], []>} : vector<32x256xf32>, vector<32x256xf32>, vector<32x32xf32> -> vector<32x32xf32>
    %106 = tpu.transpose %105, [1, 0] : vector<32x32xf32> -> vector<32x32xf32>
    %cst_31 = arith.constant dense<0.000000e+00> : vector<32x256xf32>
    %107 = tpu.matmul %106, %95, %cst_31 {dimension_numbers = #tpu.dot_dimension_numbers<[1], [0], [0], [1], [0, 0, 1, 1], [], []>} : vector<32x32xf32>, vector<32x256xf32>, vector<32x256xf32> -> vector<32x256xf32>
    %108 = tpu.concatenate %29, %55, %81, %107 in 0 : vector<32x256xf32>, vector<32x256xf32>, vector<32x256xf32>, vector<32x256xf32> -> vector<128x256xf32>
    %c0_32 = arith.constant 0 : index
    %c0_33 = arith.constant 0 : index
    %109 = vector.load %arg3[%c0_32, %c0_33] : memref<64x128xf32, #tpu.memory_space<vmem>>, vector<64x128xf32>
    %cst_34 = arith.constant dense<0.000000e+00> : vector<64x256xf32>
    %110 = tpu.matmul %109, %108, %cst_34 {dimension_numbers = #tpu.dot_dimension_numbers<[1], [0], [0], [1], [0, 0, 1, 1], [], []>} : vector<64x128xf32>, vector<128x256xf32>, vector<64x256xf32> -> vector<64x256xf32>
    %c0_35 = arith.constant 0 : index
    %c0_36 = arith.constant 0 : index
    %111 = vector.load %arg4[%c0_35, %c0_36] : memref<64x1xf32, #tpu.memory_space<vmem>>, vector<64x1xf32>
    %112 = vector.broadcast %111 : vector<64x1xf32> to vector<64x256xf32>
    %113 = arith.addf %110, %112 : vector<64x256xf32>
    %114 = arith.mulf %113, %113 : vector<64x256xf32>
    %cst_37 = arith.constant dense<0.000000e+00> : vector<256xf32>
    %115 = vector.multi_reduction <add>, %114, %cst_37 [0] : vector<64x256xf32> to vector<256xf32>
    %116 = vector.shape_cast %115 : vector<256xf32> to vector<1x256xf32>
    %117 = math.sqrt %116 : vector<1x256xf32>
    %cst_38 = arith.constant 9.99999996E-13 : f32
    %118 = vector.broadcast %cst_38 : f32 to vector<1x256xf32>
    %119 = arith.maximumf %117, %118 : vector<1x256xf32>
    %120 = vector.broadcast %119 : vector<1x256xf32> to vector<64x256xf32>
    %121 = arith.divf %113, %120 : vector<64x256xf32>
    %c0_39 = arith.constant 0 : index
    %c0_40 = arith.constant 0 : index
    %122 = vector.load %arg5[%c0_39, %c0_40] : memref<64x1xf32, #tpu.memory_space<vmem>>, vector<64x1xf32>
    %123 = vector.broadcast %122 : vector<64x1xf32> to vector<64x256xf32>
    %124 = arith.mulf %121, %123 : vector<64x256xf32>
    %cst_41 = arith.constant 8.000000e+00 : f32
    %125 = vector.broadcast %cst_41 : f32 to vector<64x256xf32>
    %126 = arith.mulf %124, %125 : vector<64x256xf32>
    %c0_42 = arith.constant 0 : index
    %c0_43 = arith.constant 0 : index
    %c0_44 = arith.constant 0 : index
    %127 = vector.load %arg6[%c0_42, %c0_43, %c0_44] : memref<1x64x256xf32, #tpu.memory_space<vmem>>, vector<1x64x256xf32>
    %128 = vector.shape_cast %127 : vector<1x64x256xf32> to vector<64x256xf32>
    %129 = vector.shape_cast %126 : vector<64x256xf32> to vector<1x64x256xf32>
    tpu.vector_store %arg6[%c0_42, %c0_43, %c0_44], %129 {strides = array<i32>} : memref<1x64x256xf32, #tpu.memory_space<vmem>>, vector<1x64x256xf32>,
    return
  }
  func.func @transform_0(%arg0: i32) -> (i32, i32, i32) {
    %c0_i32 = arith.constant 0 : i32
    %c0_i32_0 = arith.constant 0 : i32
    %c0_i32_1 = arith.constant 0 : i32
    return %arg0, %c0_i32, %c0_i32_0 : i32, i32, i32
  }
  func.func @transform_1(%arg0: i32) -> (i32, i32) {
    %c0_i32 = arith.constant 0 : i32
    %c0_i32_0 = arith.constant 0 : i32
    %c0_i32_1 = arith.constant 0 : i32
    return %c0_i32, %c0_i32_0 : i32, i32
  }
  func.func @transform_2(%arg0: i32) -> (i32, i32) {
    %c0_i32 = arith.constant 0 : i32
    %c0_i32_0 = arith.constant 0 : i32
    %c0_i32_1 = arith.constant 0 : i32
    return %c0_i32, %c0_i32_0 : i32, i32
  }
  func.func @transform_3(%arg0: i32) -> (i32, i32) {
    %c0_i32 = arith.constant 0 : i32
    %c0_i32_0 = arith.constant 0 : i32
    %c0_i32_1 = arith.constant 0 : i32
    return %c0_i32, %c0_i32_0 : i32, i32
  }
  func.func @transform_4(%arg0: i32) -> (i32, i32) {
    %c0_i32 = arith.constant 0 : i32
    %c0_i32_0 = arith.constant 0 : i32
    %c0_i32_1 = arith.constant 0 : i32
    return %c0_i32, %c0_i32_0 : i32, i32
  }
  func.func @transform_5(%arg0: i32) -> (i32, i32, i32) {
    %c0_i32 = arith.constant 0 : i32
    %c0_i32_0 = arith.constant 0 : i32
    %c0_i32_1 = arith.constant 0 : i32
    return %arg0, %c0_i32, %c0_i32_0 : i32, i32, i32
  }
}

</mosaic_0001>

<llo_original>
// kernel: tpu_custom_call.1
$region0: #{tpu_custom_call.1}
  #allocation0 [shape = 'u32[]', space=smem, size = 0x4, offset = 0x4, fixed_abs, tag = 'smem constant byte address 0x4 - core index']
  #allocation1 [shape = 'u32[144,128]{1,0:T(1,128)}', space=vmem, size = 0x12000, scoped, tag = 'internal scratch']
  %s0 = inlined_call_operand.vmem [shape: f32[2,64,256], index: 0, kind: input, shape index: {}]
  %s1 = inlined_call_operand.vmem [shape: f32[384,64], index: 1, kind: input, shape index: {}]
  %s2 = inlined_call_operand.vmem [shape: f32[64,128], index: 2, kind: input, shape index: {}]
  %s3 = inlined_call_operand.vmem [shape: f32[64,1], index: 3, kind: input, shape index: {}]
  %s4 = inlined_call_operand.vmem [shape: f32[64,1], index: 4, kind: input, shape index: {}]
  %s5 = inlined_call_operand.hbm [shape: f32[2,64,256], index: 5, kind: output, shape index: {}]
  %s6 = sld [smem:[#allocation0]]
  $region53: #{tpu_custom_call.1} parent=0
    _
  %s8 = ssub.s32 1, %s6
  %s9 = scalar_select 0, %s8, %s6
  $region1: #{tpu_custom_call.1} parent=0
    #allocation2 [shape = 'u8[131072]{0}', space=vmem, size = 0x20000, scoped, tag = 'output window, operand 0']
    #allocation3 [shape = 's32[2]{0}', space=sflag, size = 0x8, scoped, tag = 'scoped memory for tpu_custom_call.1']
    %10 = vsyncpa [#allocation3], 0
    %s11 = scalar_lea.sflag [#allocation3], 1
    %12 = vsyncpa %s11, 0
    loop: start=0, step=1, limit=4
    $region2: #{tpu_custom_call.1} parent=1 // loop_pre_header
      _
    $region3: #{tpu_custom_call.1} parent=1 // loop_header
      %s14 = sphi 0, %s18
      %p15 = scmp.ge.s32.totalorder %s14, 4
      %s24 = sphi 0, %s26
      %s27 = sphi 0, %s24
      %s28 = sphi 0, %s27
      %s44 = sphi 0, %s28
      %s48 = sphi 0, %s48
      %s50 = sphi 0, %s48
      %s51 = sphi 0, %s50
      %s65 = sphi 0, %s51
      %s69 = sphi 0, %s69
      %s71 = sphi 0, %s69
      %s72 = sphi 0, %s71
      %s86 = sphi 0, %s72
      %s90 = sphi 0, %s90
      %s92 = sphi 0, %s90
      %s93 = sphi 0, %s92
      %s107 = sphi 0, %s93
      %s111 = sphi 0, %s111
      %s113 = sphi 0, %s111
      %s114 = sphi 0, %s113
      %s128 = sphi 0, %s114
      %s134 = sphi 0, %s136
      %s137 = sphi 0, %s134
      %s138 = sphi 0, %s137
      %s154 = sphi 0, %s138
    $region4: #{tpu_custom_call.1} parent=1 // loop_header_branch
      %17 = sbr.rel (%p15) target = $region8
    $region5: #{tpu_custom_call.1} parent=1 // loop_body
      %s19 = ssub.s32 %s14, 1
      %s20 = ssub.s32 %s14, 2
      %s21 = sadd.s32 %s14, 1
      %s22 = ssub.s32 %s14, %s21
      %p23 = scmp.eq.s32.totalorder %s22, 0
      %s25 = sadd.s32 %s24, 1
      %s26 = scalar_select %p23, %s24, %s25
      %p29 = pneg %p23
      %p30 = scmp.eq.s32.totalorder %s14, 1
      %p31 = por %p29, %p30
      %p32 = scmp.ne.s32.totalorder %s24, %s27
      %p33 = scmp.eq.s32.totalorder %s14, 0
      %p34 = por %p32, %p33
      %p35 = scmp.ne.s32.totalorder %s24, %s27
      %p36 = scmp.eq.s32.totalorder %s19, 1
      %p37 = por %p35, %p36
      %p38 = scmp.ne.s32.totalorder %s27, %s28
      %p39 = scmp.eq.s32.totalorder %s19, 0
      %p40 = por %p38, %p39
      %p41 = scmp.ne.s32.totalorder %s27, %s28
      %p42 = scmp.eq.s32.totalorder %s20, 1
      %p43 = por %p41, %p42
      %p45 = scmp.ne.s32.totalorder %s28, %s44
      %p46 = scmp.eq.s32.totalorder %s20, 0
      %p47 = por %p45, %p46
      %s49 = sadd.s32 %s48, 1
      %p52 = scmp.eq.s32.totalorder %s14, 1
      %p53 = scmp.ne.s32.totalorder %s48, %s50
      %p54 = scmp.eq.s32.totalorder %s14, 0
      %p55 = por %p53, %p54
      %p56 = scmp.ne.s32.totalorder %s48, %s50
      %p57 = scmp.eq.s32.totalorder %s19, 1
      %p58 = por %p56, %p57
      %p59 = scmp.ne.s32.totalorder %s50, %s51
      %p60 = scmp.eq.s32.totalorder %s19, 0
      %p61 = por %p59, %p60
      %p62 = scmp.ne.s32.totalorder %s50, %s51
      %p63 = scmp.eq.s32.totalorder %s20, 1
      %p64 = por %p62, %p63
      %p66 = scmp.ne.s32.totalorder %s51, %s65
      %p67 = scmp.eq.s32.totalorder %s20, 0
      %p68 = por %p66, %p67
      %s70 = sadd.s32 %s69, 1
      %p73 = scmp.eq.s32.totalorder %s14, 1
      %p74 = scmp.ne.s32.totalorder %s69, %s71
      %p75 = scmp.eq.s32.totalorder %s14, 0
      %p76 = por %p74, %p75
      %p77 = scmp.ne.s32.totalorder %s69, %s71
      %p78 = scmp.eq.s32.totalorder %s19, 1
      %p79 = por %p77, %p78
      %p80 = scmp.ne.s32.totalorder %s71, %s72
      %p81 = scmp.eq.s32.totalorder %s19, 0
      %p82 = por %p80, %p81
      %p83 = scmp.ne.s32.totalorder %s71, %s72
      %p84 = scmp.eq.s32.totalorder %s20, 1
      %p85 = por %p83, %p84
      %p87 = scmp.ne.s32.totalorder %s72, %s86
      %p88 = scmp.eq.s32.totalorder %s20, 0
      %p89 = por %p87, %p88
      %s91 = sadd.s32 %s90, 1
      %p94 = scmp.eq.s32.totalorder %s14, 1
      %p95 = scmp.ne.s32.totalorder %s90, %s92
      %p96 = scmp.eq.s32.totalorder %s14, 0
      %p97 = por %p95, %p96
      %p98 = scmp.ne.s32.totalorder %s90, %s92
      %p99 = scmp.eq.s32.totalorder %s19, 1
      %p100 = por %p98, %p99
      %p101 = scmp.ne.s32.totalorder %s92, %s93
      %p102 = scmp.eq.s32.totalorder %s19, 0
      %p103 = por %p101, %p102
      %p104 = scmp.ne.s32.totalorder %s92, %s93
      %p105 = scmp.eq.s32.totalorder %s20, 1
      %p106 = por %p104, %p105
      %p108 = scmp.ne.s32.totalorder %s93, %s107
      %p109 = scmp.eq.s32.totalorder %s20, 0
      %p110 = por %p108, %p109
      %s112 = sadd.s32 %s111, 1
      %p115 = scmp.eq.s32.totalorder %s14, 1
      %p116 = scmp.ne.s32.totalorder %s111, %s113
      %p117 = scmp.eq.s32.totalorder %s14, 0
      %p118 = por %p116, %p117
      %p119 = scmp.ne.s32.totalorder %s111, %s113
      %p120 = scmp.eq.s32.totalorder %s19, 1
      %p121 = por %p119, %p120
      %p122 = scmp.ne.s32.totalorder %s113, %s114
      %p123 = scmp.eq.s32.totalorder %s19, 0
      %p124 = por %p122, %p123
      %p125 = scmp.ne.s32.totalorder %s113, %s114
      %p126 = scmp.eq.s32.totalorder %s20, 1
      %p127 = por %p125, %p126
      %p129 = scmp.ne.s32.totalorder %s114, %s128
      %p130 = scmp.eq.s32.totalorder %s20, 0
      %p131 = por %p129, %p130
      %s132 = ssub.s32 %s14, %s21
      %p133 = scmp.eq.s32.totalorder %s132, 0
      %s135 = sadd.s32 %s134, 1
      %s136 = scalar_select %p133, %s134, %s135
      %p139 = pneg %p133
      %p140 = scmp.eq.s32.totalorder %s14, 1
      %p141 = por %p139, %p140
      %p142 = scmp.ne.s32.totalorder %s134, %s137
      %p143 = scmp.eq.s32.totalorder %s14, 0
      %p144 = por %p142, %p143
      %p145 = scmp.ne.s32.totalorder %s134, %s137
      %p146 = scmp.eq.s32.totalorder %s19, 1
      %p147 = por %p145, %p146
      %p148 = scmp.ne.s32.totalorder %s137, %s138
      %p149 = scmp.eq.s32.totalorder %s19, 0
      %p150 = por %p148, %p149
      %p151 = scmp.ne.s32.totalorder %s137, %s138
      %p152 = scmp.eq.s32.totalorder %s20, 1
      %p153 = por %p151, %p152
      %p155 = scmp.ne.s32.totalorder %s138, %s154
      %p156 = scmp.eq.s32.totalorder %s20, 0
      %p157 = por %p155, %p156
      %p158 = scmp.le.s32.totalorder 1, %s14
      %p159 = scmp.lt.s32.totalorder %s14, 3
      %p160 = pnand %p158, %p159
      %p161 = pneg %p160
      // Predicated region
      $region9: #{tpu_custom_call.1} parent=5 // pred_check
        _
      $region10: #{tpu_custom_call.1} parent=5 // pred_check_branch
        %163 = sbr.rel (%p160) target = $region12
      $region11: #{tpu_custom_call.1} parent=5 // pred_region
        %s164 = ssub.s32 %s14, 1
        // Predicated region
        $region13: #{tpu_custom_call.1} parent=11 // pred_check
          %p165 = pneg %p61
        $region14: #{tpu_custom_call.1} parent=11 // pred_check_branch
          %167 = sbr.rel (%p165) target = $region16
        $region15: #{tpu_custom_call.1} parent=11 // pred_region
          _
        $region16: #{tpu_custom_call.1} parent=11 // pred_fallthru
          _
        // Predicated region
        $region17: #{tpu_custom_call.1} parent=11 // pred_check
          %p168 = pneg %p82
        $region18: #{tpu_custom_call.1} parent=11 // pred_check_branch
          %170 = sbr.rel (%p168) target = $region20
        $region19: #{tpu_custom_call.1} parent=11 // pred_region
          _
        $region20: #{tpu_custom_call.1} parent=11 // pred_fallthru
          _
        // Predicated region
        $region21: #{tpu_custom_call.1} parent=11 // pred_check
          %p171 = pneg %p103
        $region22: #{tpu_custom_call.1} parent=11 // pred_check_branch
          %173 = sbr.rel (%p171) target = $region24
        $region23: #{tpu_custom_call.1} parent=11 // pred_region
          _
        $region24: #{tpu_custom_call.1} parent=11 // pred_fallthru
          _
        // Predicated region
        $region25: #{tpu_custom_call.1} parent=11 // pred_check
          %p174 = pneg %p124
        $region26: #{tpu_custom_call.1} parent=11 // pred_check_branch
          %176 = sbr.rel (%p174) target = $region28
        $region27: #{tpu_custom_call.1} parent=11 // pred_region
          _
        $region28: #{tpu_custom_call.1} parent=11 // pred_fallthru
          _
      $region12: #{tpu_custom_call.1} parent=5 // pred_fallthru
        _
      %p177 = scmp.lt.s32.totalorder %s14, 2
      // Predicated region
      $region29: #{tpu_custom_call.1} parent=5 // pred_check
        %p178 = pneg %p177
      $region30: #{tpu_custom_call.1} parent=5 // pred_check_branch
        %180 = sbr.rel (%p178) target = $region32
      $region31: #{tpu_custom_call.1} parent=5 // pred_region
        // Predicated region
        $region33: #{tpu_custom_call.1} parent=31 // pred_check
          %p181 = pneg %p34
        $region34: #{tpu_custom_call.1} parent=31 // pred_check_branch
          %183 = sbr.rel (%p181) target = $region36
        $region35: #{tpu_custom_call.1} parent=31 // pred_region
          %p184 = scmp.lt.s32.totalorder %s14, 1
          %s185 = scalar_select %p184, %s14, 1
          %s186 = smul.addr %s185, 16
          %s187 = smul.addr %s186, 8
          %s188 = scalar_lea.vmem %s0, %s187
        $region36: #{tpu_custom_call.1} parent=31 // pred_fallthru
          _
      $region32: #{tpu_custom_call.1} parent=5 // pred_fallthru
        _
      %p189 = scmp.le.s32.totalorder 1, %s14
      %p190 = scmp.lt.s32.totalorder %s14, 3
      %p191 = pnand %p189, %p190
      %p192 = pneg %p191
      // Predicated region
      $region37: #{tpu_custom_call.1} parent=5 // pred_check
        _
      $region38: #{tpu_custom_call.1} parent=5 // pred_check_branch
        %194 = sbr.rel (%p191) target = $region40
      $region39: #{tpu_custom_call.1} parent=5 // pred_region
        %s195 = ssub.s32 %s14, 1
        %p196 = scmp.lt.s32.totalorder %s19, 1
        %s197 = scalar_select %p196, %s19, 1
        %s198 = smul.addr %s197, 16
        %s199 = smul.addr %s198, 8
        %s200 = scalar_lea.vmem %s0, %s199
        %p201 = pneg %p40
        %p202 = pneg %p37
        %p203 = pneg %p61
        %p204 = pneg %p58
        %p205 = pneg %p82
        %p206 = pneg %p79
        %p207 = pneg %p103
        %p208 = pneg %p100
        %p209 = pneg %p124
        %p210 = pneg %p121
        %p211 = pneg %p150
        %p212 = pneg %p147
        %s213 = sand.u32 %s137, 1
        %s214 = scalar_lea.sflag [#allocation3], %s213
        %s215 = sand.u32 %s137, 1
        %s216 = smul.addr %s215, 128
        %s217 = scalar_lea.vmem [#allocation2], %s216
        %p218 = scmp.lt.s32.totalorder %s19, 1
        %s219 = scalar_select %p218, %s19, 1
        %s220 = smul.addr %s219, 16
        %s221 = smul.addr %s220, 8
        %s222 = scalar_lea.vmem %s0, %s221
        %v223 = vld [vmem:[%s222] sm:$0xff]
        %v224 = vld [vmem:[%s222 + $0x8] sm:$0xff]
        %v225 = vld [vmem:[%s222 + $0x10] sm:$0xff]
        %v226 = vld [vmem:[%s222 + $0x18] sm:$0xff]
        %v227 = vld [vmem:[%s222 + $0x20] sm:$0xff]
        %v228 = vld [vmem:[%s222 + $0x28] sm:$0xff]
        %v229 = vld [vmem:[%s222 + $0x30] sm:$0xff]
        %v230 = vld [vmem:[%s222 + $0x38] sm:$0xff]
        %v231 = vld [vmem:[%s222 + $0x40] sm:$0xff]
        %v232 = vld [vmem:[%s222 + $0x48] sm:$0xff]
        %v233 = vld [vmem:[%s222 + $0x50] sm:$0xff]
        %v234 = vld [vmem:[%s222 + $0x58] sm:$0xff]
        %v235 = vld [vmem:[%s222 + $0x60] sm:$0xff]
        %v236 = vld [vmem:[%s222 + $0x68] sm:$0xff]
        %v237 = vld [vmem:[%s222 + $0x70] sm:$0xff]
        %v238 = vld [vmem:[%s222 + $0x78] sm:$0xff]
        %v239 = vld [vmem:[%s1] sm:$0xff]
        %v240 = vld [vmem:[%s1 + $0x8] sm:$0xff]
        %v241 = vld [vmem:[%s1 + $0x10] sm:$0xff]
        %v242 = vld [vmem:[%s1 + $0x18] sm:$0xff]
        %v243 = vld [vmem:[%s1 + $0x20] sm:$0xff]
        %v244 = vld [vmem:[%s1 + $0x28] sm:$0xff]
        %v245 = vld [vmem:[%s1 + $0x30] sm:$0xff]
        %v246 = vld [vmem:[%s1 + $0x38] sm:$0xff]
        %v247 = vld [vmem:[%s1 + $0x40] sm:$0xff]
        %v248 = vld [vmem:[%s1 + $0x48] sm:$0xff]
        %v249 = vld [vmem:[%s1 + $0x50] sm:$0xff]
        %v250 = vld [vmem:[%s1 + $0x58] sm:$0xff]
        %v251 = vld [vmem:[%s1 + $0x60] sm:$0xff]
        %v252 = vld [vmem:[%s1 + $0x68] sm:$0xff]
        %v253 = vld [vmem:[%s1 + $0x70] sm:$0xff]
        %v254 = vld [vmem:[%s1 + $0x78] sm:$0xff]
        %v255 = vld [vmem:[%s1 + $0x80] sm:$0xff]
        %v256 = vld [vmem:[%s1 + $0x88] sm:$0xff]
        %v257 = vld [vmem:[%s1 + $0x90] sm:$0xff]
        %v258 = vld [vmem:[%s1 + $0x98] sm:$0xff]
        %v259 = vld [vmem:[%s1 + $0xa0] sm:$0xff]
        %v260 = vld [vmem:[%s1 + $0xa8] sm:$0xff]
        %v261 = vld [vmem:[%s1 + $0xb0] sm:$0xff]
        %v262 = vld [vmem:[%s1 + $0xb8] sm:$0xff]
        %v263 = vld [vmem:[%s1 + $0xc0] sm:$0xff]
        %v264 = vld [vmem:[%s1 + $0xc8] sm:$0xff]
        %v265 = vld [vmem:[%s1 + $0xd0] sm:$0xff]
        %v266 = vld [vmem:[%s1 + $0xd8] sm:$0xff]
        %v267 = vld [vmem:[%s1 + $0xe0] sm:$0xff]
        %v268 = vld [vmem:[%s1 + $0xe8] sm:$0xff]
        %v269 = vld [vmem:[%s1 + $0xf0] sm:$0xff]
        %v270 = vld [vmem:[%s1 + $0xf8] sm:$0xff]
        %v271 = vld [vmem:[%s1 + $0x100] sm:$0xff]
        %v272 = vld [vmem:[%s1 + $0x108] sm:$0xff]
        %v273 = vld [vmem:[%s1 + $0x110] sm:$0xff]
        %v274 = vld [vmem:[%s1 + $0x118] sm:$0xff]
        %v275 = vld [vmem:[%s1 + $0x120] sm:$0xff]
        %v276 = vld [vmem:[%s1 + $0x128] sm:$0xff]
        %v277 = vld [vmem:[%s1 + $0x130] sm:$0xff]
        %v278 = vld [vmem:[%s1 + $0x138] sm:$0xff]
        %v279 = vld [vmem:[%s1 + $0x140] sm:$0xff]
        %v280 = vld [vmem:[%s1 + $0x148] sm:$0xff]
        %v281 = vld [vmem:[%s1 + $0x150] sm:$0xff]
        %v282 = vld [vmem:[%s1 + $0x158] sm:$0xff]
        %v283 = vld [vmem:[%s1 + $0x160] sm:$0xff]
        %v284 = vld [vmem:[%s1 + $0x168] sm:$0xff]
        %v285 = vld [vmem:[%s1 + $0x170] sm:$0xff]
        %v286 = vld [vmem:[%s1 + $0x178] sm:$0xff]
        %vm287 = vcmask 523264
        %v289 = vsel %vm287, %v239, 0
        %v292 = vsel %vm287, %v240, 0
        %v295 = vsel %vm287, %v241, 0
        %v298 = vsel %vm287, %v242, 0
        %v301 = vsel %vm287, %v243, 0
        %v304 = vsel %vm287, %v244, 0
        %v307 = vsel %vm287, %v245, 0
        %v310 = vsel %vm287, %v246, 0
        %v313 = vsel %vm287, %v247, 0
        %v316 = vsel %vm287, %v248, 0
        %v319 = vsel %vm287, %v249, 0
        %v322 = vsel %vm287, %v250, 0
        %v325 = vsel %vm287, %v251, 0
        %v328 = vsel %vm287, %v252, 0
        %v331 = vsel %vm287, %v253, 0
        %v334 = vsel %vm287, %v254, 0
        %v337 = vsel %vm287, %v255, 0
        %v340 = vsel %vm287, %v256, 0
        %v343 = vsel %vm287, %v257, 0
        %v346 = vsel %vm287, %v258, 0
        %v349 = vsel %vm287, %v259, 0
        %v352 = vsel %vm287, %v260, 0
        %v355 = vsel %vm287, %v261, 0
        %v358 = vsel %vm287, %v262, 0
        %v361 = vsel %vm287, %v263, 0
        %v364 = vsel %vm287, %v264, 0
        %v367 = vsel %vm287, %v265, 0
        %v370 = vsel %vm287, %v266, 0
        %v373 = vsel %vm287, %v267, 0
        %v376 = vsel %vm287, %v268, 0
        %v379 = vsel %vm287, %v269, 0
        %v382 = vsel %vm287, %v270, 0
        %v385 = vsel %vm287, %v271, 0
        %v388 = vsel %vm287, %v272, 0
        %v391 = vsel %vm287, %v273, 0
        %v394 = vsel %vm287, %v274, 0
        %v397 = vsel %vm287, %v275, 0
        %v400 = vsel %vm287, %v276, 0
        %v403 = vsel %vm287, %v277, 0
        %v406 = vsel %vm287, %v278, 0
        %v409 = vsel %vm287, %v279, 0
        %v412 = vsel %vm287, %v280, 0
        %v415 = vsel %vm287, %v281, 0
        %v418 = vsel %vm287, %v282, 0
        %v421 = vsel %vm287, %v283, 0
        %v424 = vsel %vm287, %v284, 0
        %v427 = vsel %vm287, %v285, 0
        %v430 = vsel %vm287, %v286, 0
        %432 = vmatprep.subr.mxu0 0.0
        %433 = vmatpush1.msra.mxu0 0.0
        %434 = vmatprep.subr.mxu0 0.0
        %435 = vmatpush1.msra.mxu0 0.0
        %436 = vmatprep.subr.mxu0 0.0
        %437 = vmatpush1.msra.mxu0 0.0
        %438 = vmatprep.subr.mxu0 0.0
        %439 = vmatpush1.msra.mxu0 0.0
        %440 = vmatprep.subr.mxu0 0.0
        %441 = vmatpush1.msra.mxu0 0.0
        %442 = vmatprep.subr.mxu0 0.0
        %443 = vmatpush1.msra.mxu0 0.0
        %444 = vmatprep.subr.mxu0 0.0
        %445 = vmatpush1.msra.mxu0 0.0
        %446 = vmatprep.subr.mxu0 0.0
        %447 = vmatpush1.msra.mxu0 0.0
        %448 = vmatprep.subr.mxu0 %v238
        %449 = vmatpush1.msra.mxu0 %v237
        %450 = vmatprep.subr.mxu0 %v236
        %451 = vmatpush1.msra.mxu0 %v235
        %452 = vmatprep.subr.mxu0 %v234
        %453 = vmatpush1.msra.mxu0 %v233
        %454 = vmatprep.subr.mxu0 %v232
        %455 = vmatpush1.msra.mxu0 %v231
        %456 = vmatprep.subr.mxu0 %v230
        %457 = vmatpush1.msra.mxu0 %v229
        %458 = vmatprep.subr.mxu0 %v228
        %459 = vmatpush1.msra.mxu0 %v227
        %460 = vmatprep.subr.mxu0 %v226
        %461 = vmatpush1.msra.mxu0 %v225
        %462 = vmatprep.subr.mxu0 %v224
        %463 = vmatpush1.msra.mxu0 %v223
        %464 = vmatprep.subr.mxu0 0.0
        %465 = vmatpush2.msra.mxu0 0.0
        %466 = vmatprep.subr.mxu0 0.0
        %467 = vmatpush2.msra.mxu0 0.0
        %468 = vmatprep.subr.mxu0 0.0
        %469 = vmatpush2.msra.mxu0 0.0
        %470 = vmatprep.subr.mxu0 0.0
        %471 = vmatpush2.msra.mxu0 0.0
        %472 = vmatprep.subr.mxu0 0.0
        %473 = vmatpush2.msra.mxu0 0.0
        %474 = vmatprep.subr.mxu0 0.0
        %475 = vmatpush2.msra.mxu0 0.0
        %476 = vmatprep.subr.mxu0 0.0
        %477 = vmatpush2.msra.mxu0 0.0
        %478 = vmatprep.subr.mxu0 0.0
        %479 = vmatpush2.msra.mxu0 0.0
        %480 = vmatprep.subr.mxu0 0.0
        %481 = vmatpush2.msra.mxu0 0.0
        %482 = vmatprep.subr.mxu0 0.0
        %483 = vmatpush2.msra.mxu0 0.0
        %484 = vmatprep.subr.mxu0 0.0
        %485 = vmatpush2.msra.mxu0 0.0
        %486 = vmatprep.subr.mxu0 0.0
        %487 = vmatpush2.msra.mxu0 0.0
        %488 = vmatprep.subr.mxu0 0.0
        %489 = vmatpush2.msra.mxu0 0.0
        %490 = vmatprep.subr.mxu0 0.0
        %491 = vmatpush2.msra.mxu0 0.0
        %492 = vmatprep.subr.mxu0 0.0
        %493 = vmatpush2.msra.mxu0 0.0
        %494 = vmatprep.subr.mxu0 0.0
        %495 = vmatpush2.msra.mxu0 0.0
        %496 = vmatprep.mubr.f32.mxu0 0.0
        %497 = vmatmul.mubr.f32.gmra.mxu0 %v289
        %v498 = vpop.f32.mrf.mxu0
        %v499 = vadd.f32 0.0, %v498
        %v500 = vpop.f32.mrf.mxu0
        %v501 = vadd.f32 0.0, %v500
        %502 = vmatprep.mubr.f32.mxu0 0.0
        %503 = vmatmul.mubr.f32.gmra.mxu0 %v292
        %v504 = vpop.f32.mrf.mxu0
        %v505 = vadd.f32 0.0, %v504
        %v506 = vpop.f32.mrf.mxu0
        %v507 = vadd.f32 0.0, %v506
        %508 = vmatprep.mubr.f32.mxu0 0.0
        %509 = vmatmul.mubr.f32.gmra.mxu0 %v295
        %v510 = vpop.f32.mrf.mxu0
        %v511 = vadd.f32 0.0, %v510
        %v512 = vpop.f32.mrf.mxu0
        %v513 = vadd.f32 0.0, %v512
        %514 = vmatprep.mubr.f32.mxu0 0.0
        %515 = vmatmul.mubr.f32.gmra.mxu0 %v298
        %v516 = vpop.f32.mrf.mxu0
        %v517 = vadd.f32 0.0, %v516
        %v518 = vpop.f32.mrf.mxu0
        %v519 = vadd.f32 0.0, %v518
        %520 = vmatprep.mubr.f32.mxu0 0.0
        %521 = vmatmul.mubr.f32.gmra.mxu0 %v301
        %v522 = vpop.f32.mrf.mxu0
        %v523 = vadd.f32 0.0, %v522
        %v524 = vpop.f32.mrf.mxu0
        %v525 = vadd.f32 0.0, %v524
        %526 = vmatprep.mubr.f32.mxu0 0.0
        %527 = vmatmul.mubr.f32.gmra.mxu0 %v304
        %v528 = vpop.f32.mrf.mxu0
        %v529 = vadd.f32 0.0, %v528
        %v530 = vpop.f32.mrf.mxu0
        %v531 = vadd.f32 0.0, %v530
        %532 = vmatprep.mubr.f32.mxu0 0.0
        %533 = vmatmul.mubr.f32.gmra.mxu0 %v307
        %v534 = vpop.f32.mrf.mxu0
        %v535 = vadd.f32 0.0, %v534
        %v536 = vpop.f32.mrf.mxu0
        %v537 = vadd.f32 0.0, %v536
        %538 = vmatprep.mubr.f32.mxu0 0.0
        %539 = vmatmul.mubr.f32.gmra.mxu0 %v310
        %v540 = vpop.f32.mrf.mxu0
        %v541 = vadd.f32 0.0, %v540
        %v542 = vpop.f32.mrf.mxu0
        %v543 = vadd.f32 0.0, %v542
        %544 = vmatprep.mubr.f32.mxu0 0.0
        %545 = vmatmul.mubr.f32.gmra.mxu0 %v313
        %v546 = vpop.f32.mrf.mxu0
        %v547 = vadd.f32 0.0, %v546
        %v548 = vpop.f32.mrf.mxu0
        %v549 = vadd.f32 0.0, %v548
        %550 = vmatprep.mubr.f32.mxu0 0.0
        %551 = vmatmul.mubr.f32.gmra.mxu0 %v316
        %v552 = vpop.f32.mrf.mxu0
        %v553 = vadd.f32 0.0, %v552
        %v554 = vpop.f32.mrf.mxu0
        %v555 = vadd.f32 0.0, %v554
        %556 = vmatprep.mubr.f32.mxu0 0.0
        %557 = vmatmul.mubr.f32.gmra.mxu0 %v319
        %v558 = vpop.f32.mrf.mxu0
        %v559 = vadd.f32 0.0, %v558
        %v560 = vpop.f32.mrf.mxu0
        %v561 = vadd.f32 0.0, %v560
        %562 = vmatprep.mubr.f32.mxu0 0.0
        %563 = vmatmul.mubr.f32.gmra.mxu0 %v322
        %v564 = vpop.f32.mrf.mxu0
        %v565 = vadd.f32 0.0, %v564
        %v566 = vpop.f32.mrf.mxu0
        %v567 = vadd.f32 0.0, %v566
        %568 = vmatprep.mubr.f32.mxu0 0.0
        %569 = vmatmul.mubr.f32.gmra.mxu0 %v325
        %v570 = vpop.f32.mrf.mxu0
        %v571 = vadd.f32 0.0, %v570
        %v572 = vpop.f32.mrf.mxu0
        %v573 = vadd.f32 0.0, %v572
        %574 = vmatprep.mubr.f32.mxu0 0.0
        %575 = vmatmul.mubr.f32.gmra.mxu0 %v328
        %v576 = vpop.f32.mrf.mxu0
        %v577 = vadd.f32 0.0, %v576
        %v578 = vpop.f32.mrf.mxu0
        %v579 = vadd.f32 0.0, %v578
        %580 = vmatprep.mubr.f32.mxu0 0.0
        %581 = vmatmul.mubr.f32.gmra.mxu0 %v331
        %v582 = vpop.f32.mrf.mxu0
        %v583 = vadd.f32 0.0, %v582
        %v584 = vpop.f32.mrf.mxu0
        %v585 = vadd.f32 0.0, %v584
        %586 = vmatprep.mubr.f32.mxu0 0.0
        %587 = vmatmul.mubr.f32.gmra.mxu0 %v334
        %v588 = vpop.f32.mrf.mxu0
        %v589 = vadd.f32 0.0, %v588
        %v590 = vpop.f32.mrf.mxu0
        %v591 = vadd.f32 0.0, %v590
        %592 = vmatprep.mubr.f32.mxu0 0.0
        %593 = vmatmul.mubr.f32.gmra.mxu0 %v337
        %v594 = vpop.f32.mrf.mxu0
        %v595 = vadd.f32 0.0, %v594
        %v596 = vpop.f32.mrf.mxu0
        %v597 = vadd.f32 0.0, %v596
        %598 = vmatprep.mubr.f32.mxu0 0.0
        %599 = vmatmul.mubr.f32.gmra.mxu0 %v340
        %v600 = vpop.f32.mrf.mxu0
        %v601 = vadd.f32 0.0, %v600
        %v602 = vpop.f32.mrf.mxu0
        %v603 = vadd.f32 0.0, %v602
        %604 = vmatprep.mubr.f32.mxu0 0.0
        %605 = vmatmul.mubr.f32.gmra.mxu0 %v343
        %v606 = vpop.f32.mrf.mxu0
        %v607 = vadd.f32 0.0, %v606
        %v608 = vpop.f32.mrf.mxu0
        %v609 = vadd.f32 0.0, %v608
        %610 = vmatprep.mubr.f32.mxu0 0.0
        %611 = vmatmul.mubr.f32.gmra.mxu0 %v346
        %v612 = vpop.f32.mrf.mxu0
        %v613 = vadd.f32 0.0, %v612
        %v614 = vpop.f32.mrf.mxu0
        %v615 = vadd.f32 0.0, %v614
        %616 = vmatprep.mubr.f32.mxu0 0.0
        %617 = vmatmul.mubr.f32.gmra.mxu0 %v349
        %v618 = vpop.f32.mrf.mxu0
        %v619 = vadd.f32 0.0, %v618
        %v620 = vpop.f32.mrf.mxu0
        %v621 = vadd.f32 0.0, %v620
        %622 = vmatprep.mubr.f32.mxu0 0.0
        %623 = vmatmul.mubr.f32.gmra.mxu0 %v352
        %v624 = vpop.f32.mrf.mxu0
        %v625 = vadd.f32 0.0, %v624
        %v626 = vpop.f32.mrf.mxu0
        %v627 = vadd.f32 0.0, %v626
        %628 = vmatprep.mubr.f32.mxu0 0.0
        %629 = vmatmul.mubr.f32.gmra.mxu0 %v355
        %v630 = vpop.f32.mrf.mxu0
        %v631 = vadd.f32 0.0, %v630
        %v632 = vpop.f32.mrf.mxu0
        %v633 = vadd.f32 0.0, %v632
        %634 = vmatprep.mubr.f32.mxu0 0.0
        %635 = vmatmul.mubr.f32.gmra.mxu0 %v358
        %v636 = vpop.f32.mrf.mxu0
        %v637 = vadd.f32 0.0, %v636
        %v638 = vpop.f32.mrf.mxu0
        %v639 = vadd.f32 0.0, %v638
        %640 = vmatprep.mubr.f32.mxu0 0.0
        %641 = vmatmul.mubr.f32.gmra.mxu0 %v361
        %v642 = vpop.f32.mrf.mxu0
        %v643 = vadd.f32 0.0, %v642
        %v644 = vpop.f32.mrf.mxu0
        %v645 = vadd.f32 0.0, %v644
        %646 = vmatprep.mubr.f32.mxu0 0.0
        %647 = vmatmul.mubr.f32.gmra.mxu0 %v364
        %v648 = vpop.f32.mrf.mxu0
        %v649 = vadd.f32 0.0, %v648
        %v650 = vpop.f32.mrf.mxu0
        %v651 = vadd.f32 0.0, %v650
        %652 = vmatprep.mubr.f32.mxu0 0.0
        %653 = vmatmul.mubr.f32.gmra.mxu0 %v367
        %v654 = vpop.f32.mrf.mxu0
        %v655 = vadd.f32 0.0, %v654
        %v656 = vpop.f32.mrf.mxu0
        %v657 = vadd.f32 0.0, %v656
        %658 = vmatprep.mubr.f32.mxu0 0.0
        %659 = vmatmul.mubr.f32.gmra.mxu0 %v370
        %v660 = vpop.f32.mrf.mxu0
        %v661 = vadd.f32 0.0, %v660
        %v662 = vpop.f32.mrf.mxu0
        %v663 = vadd.f32 0.0, %v662
        %664 = vmatprep.mubr.f32.mxu0 0.0
        %665 = vmatmul.mubr.f32.gmra.mxu0 %v373
        %v666 = vpop.f32.mrf.mxu0
        %v667 = vadd.f32 0.0, %v666
        %v668 = vpop.f32.mrf.mxu0
        %v669 = vadd.f32 0.0, %v668
        %670 = vmatprep.mubr.f32.mxu0 0.0
        %671 = vmatmul.mubr.f32.gmra.mxu0 %v376
        %v672 = vpop.f32.mrf.mxu0
        %v673 = vadd.f32 0.0, %v672
        %v674 = vpop.f32.mrf.mxu0
        %v675 = vadd.f32 0.0, %v674
        %676 = vmatprep.mubr.f32.mxu0 0.0
        %677 = vmatmul.mubr.f32.gmra.mxu0 %v379
        %v678 = vpop.f32.mrf.mxu0
        %v679 = vadd.f32 0.0, %v678
        %v680 = vpop.f32.mrf.mxu0
        %v681 = vadd.f32 0.0, %v680
        %682 = vmatprep.mubr.f32.mxu0 0.0
        %683 = vmatmul.mubr.f32.gmra.mxu0 %v382
        %v684 = vpop.f32.mrf.mxu0
        %v685 = vadd.f32 0.0, %v684
        %v686 = vpop.f32.mrf.mxu0
        %v687 = vadd.f32 0.0, %v686
        %688 = vmatprep.mubr.f32.mxu0 0.0
        %689 = vmatmul.mubr.f32.gmra.mxu0 %v385
        %v690 = vpop.f32.mrf.mxu0
        %v691 = vadd.f32 0.0, %v690
        %v692 = vpop.f32.mrf.mxu0
        %v693 = vadd.f32 0.0, %v692
        %694 = vmatprep.mubr.f32.mxu0 0.0
        %695 = vmatmul.mubr.f32.gmra.mxu0 %v388
        %v696 = vpop.f32.mrf.mxu0
        %v697 = vadd.f32 0.0, %v696
        %v698 = vpop.f32.mrf.mxu0
        %v699 = vadd.f32 0.0, %v698
        %700 = vmatprep.mubr.f32.mxu0 0.0
        %701 = vmatmul.mubr.f32.gmra.mxu0 %v391
        %v702 = vpop.f32.mrf.mxu0
        %v703 = vadd.f32 0.0, %v702
        %v704 = vpop.f32.mrf.mxu0
        %v705 = vadd.f32 0.0, %v704
        %706 = vmatprep.mubr.f32.mxu0 0.0
        %707 = vmatmul.mubr.f32.gmra.mxu0 %v394
        %v708 = vpop.f32.mrf.mxu0
        %v709 = vadd.f32 0.0, %v708
        %v710 = vpop.f32.mrf.mxu0
        %v711 = vadd.f32 0.0, %v710
        %712 = vmatprep.mubr.f32.mxu0 0.0
        %713 = vmatmul.mubr.f32.gmra.mxu0 %v397
        %v714 = vpop.f32.mrf.mxu0
        %v715 = vadd.f32 0.0, %v714
        %v716 = vpop.f32.mrf.mxu0
        %v717 = vadd.f32 0.0, %v716
        %718 = vmatprep.mubr.f32.mxu0 0.0
        %719 = vmatmul.mubr.f32.gmra.mxu0 %v400
        %v720 = vpop.f32.mrf.mxu0
        %v721 = vadd.f32 0.0, %v720
        %v722 = vpop.f32.mrf.mxu0
        %v723 = vadd.f32 0.0, %v722
        %724 = vmatprep.mubr.f32.mxu0 0.0
        %725 = vmatmul.mubr.f32.gmra.mxu0 %v403
        %v726 = vpop.f32.mrf.mxu0
        %v727 = vadd.f32 0.0, %v726
        %v728 = vpop.f32.mrf.mxu0
        %v729 = vadd.f32 0.0, %v728
        %730 = vmatprep.mubr.f32.mxu0 0.0
        %731 = vmatmul.mubr.f32.gmra.mxu0 %v406
        %v732 = vpop.f32.mrf.mxu0
        %v733 = vadd.f32 0.0, %v732
        %v734 = vpop.f32.mrf.mxu0
        %v735 = vadd.f32 0.0, %v734
        %736 = vmatprep.mubr.f32.mxu0 0.0
        %737 = vmatmul.mubr.f32.gmra.mxu0 %v409
        %v738 = vpop.f32.mrf.mxu0
        %v739 = vadd.f32 0.0, %v738
        %v740 = vpop.f32.mrf.mxu0
        %v741 = vadd.f32 0.0, %v740
        %742 = vmatprep.mubr.f32.mxu0 0.0
        %743 = vmatmul.mubr.f32.gmra.mxu0 %v412
        %v744 = vpop.f32.mrf.mxu0
        %v745 = vadd.f32 0.0, %v744
        %v746 = vpop.f32.mrf.mxu0
        %v747 = vadd.f32 0.0, %v746
        %748 = vmatprep.mubr.f32.mxu0 0.0
        %749 = vmatmul.mubr.f32.gmra.mxu0 %v415
        %v750 = vpop.f32.mrf.mxu0
        %v751 = vadd.f32 0.0, %v750
        %v752 = vpop.f32.mrf.mxu0
        %v753 = vadd.f32 0.0, %v752
        %754 = vmatprep.mubr.f32.mxu0 0.0
        %755 = vmatmul.mubr.f32.gmra.mxu0 %v418
        %v756 = vpop.f32.mrf.mxu0
        %v757 = vadd.f32 0.0, %v756
        %v758 = vpop.f32.mrf.mxu0
        %v759 = vadd.f32 0.0, %v758
        %760 = vmatprep.mubr.f32.mxu0 0.0
        %761 = vmatmul.mubr.f32.gmra.mxu0 %v421
        %v762 = vpop.f32.mrf.mxu0
        %v763 = vadd.f32 0.0, %v762
        %v764 = vpop.f32.mrf.mxu0
        %v765 = vadd.f32 0.0, %v764
        %766 = vmatprep.mubr.f32.mxu0 0.0
        %767 = vmatmul.mubr.f32.gmra.mxu0 %v424
        %v768 = vpop.f32.mrf.mxu0
        %v769 = vadd.f32 0.0, %v768
        %v770 = vpop.f32.mrf.mxu0
        %v771 = vadd.f32 0.0, %v770
        %772 = vmatprep.mubr.f32.mxu0 0.0
        %773 = vmatmul.mubr.f32.gmra.mxu0 %v427
        %v774 = vpop.f32.mrf.mxu0
        %v775 = vadd.f32 0.0, %v774
        %v776 = vpop.f32.mrf.mxu0
        %v777 = vadd.f32 0.0, %v776
        %778 = vmatprep.mubr.f32.mxu0 0.0
        %779 = vmatmul.mubr.f32.gmra.mxu0 %v430
        %v780 = vpop.f32.mrf.mxu0
        %v781 = vadd.f32 0.0, %v780
        %v782 = vpop.f32.mrf.mxu0
        %v783 = vadd.f32 0.0, %v782
        %784 = vdwg.mxu0
        %v785 = vmax.f32 %v499, %v511
        %v786 = vmax.f32 %v505, %v517
        %v787 = vmax.f32 %v785, %v786
        %v788 = vrot.slane %v787, 4
        %v789 = vmax.f32 %v787, %v788
        %v790 = vrot.slane %v789, 2
        %v791 = vmax.f32 %v789, %v790
        %v792 = vrot.slane %v791, 1
        %v793 = vmax.f32 %v791, %v792
        %v794 = vmax.f32 %v501, %v513
        %v795 = vmax.f32 %v507, %v519
        %v796 = vmax.f32 %v794, %v795
        %v797 = vrot.slane %v796, 4
        %v798 = vmax.f32 %v796, %v797
        %v799 = vrot.slane %v798, 2
        %v800 = vmax.f32 %v798, %v799
        %v801 = vrot.slane %v800, 1
        %v802 = vmax.f32 %v800, %v801
        %v803 = vsub.f32 %v499, %v793
        %v804 = vsub.f32 %v501, %v802
        %v805 = vsub.f32 %v505, %v793
        %v806 = vsub.f32 %v507, %v802
        %v807 = vsub.f32 %v511, %v793
        %v808 = vsub.f32 %v513, %v802
        %v809 = vsub.f32 %v517, %v793
        %v810 = vsub.f32 %v519, %v802
        %v811 = vmul.f32 %v803, 1.442695
        %v812 = vpow.pop %v811
        %v813 = vmul.f32 %v804, 1.442695
        %v814 = vpow.pop %v813
        %v815 = vmul.f32 %v805, 1.442695
        %v816 = vpow.pop %v815
        %v817 = vmul.f32 %v806, 1.442695
        %v818 = vpow.pop %v817
        %v819 = vmul.f32 %v807, 1.442695
        %v820 = vpow.pop %v819
        %v821 = vmul.f32 %v808, 1.442695
        %v822 = vpow.pop %v821
        %v823 = vmul.f32 %v809, 1.442695
        %v824 = vpow.pop %v823
        %v825 = vmul.f32 %v810, 1.442695
        %v826 = vpow.pop %v825
        %v827 = vadd.f32 %v812, %v816
        %v828 = vadd.f32 %v827, %v820
        %v829 = vadd.f32 %v828, %v824
        %v830 = vrot.slane %v829, 4
        %v831 = vadd.f32 %v829, %v830
        %v832 = vrot.slane %v831, 2
        %v833 = vadd.f32 %v831, %v832
        %v834 = vrot.slane %v833, 1
        %v835 = vadd.f32 %v833, %v834
        %v836 = vadd.f32 %v814, %v818
        %v837 = vadd.f32 %v836, %v822
        %v838 = vadd.f32 %v837, %v826
        %v839 = vrot.slane %v838, 4
        %v840 = vadd.f32 %v838, %v839
        %v841 = vrot.slane %v840, 2
        %v842 = vadd.f32 %v840, %v841
        %v843 = vrot.slane %v842, 1
        %v844 = vadd.f32 %v842, %v843
        %v845 = vrcp.pop %v835
        %v846 = vmul.f32 %v812, %v845
        %v847 = vrcp.pop %v844
        %v848 = vmul.f32 %v814, %v847
        %v849 = vmul.f32 %v816, %v845
        %v850 = vmul.f32 %v818, %v847
        %v851 = vmul.f32 %v820, %v845
        %v852 = vmul.f32 %v822, %v847
        %v853 = vmul.f32 %v824, %v845
        %v854 = vmul.f32 %v826, %v847
        %v855 = vmul.f32 %v846, 0.17677669
        %v856 = vmul.f32 %v848, 0.17677669
        %v857 = vmul.f32 %v849, 0.17677669
        %v858 = vmul.f32 %v850, 0.17677669
        %v859 = vmul.f32 %v851, 0.17677669
        %v860 = vmul.f32 %v852, 0.17677669
        %v861 = vmul.f32 %v853, 0.17677669
        %v862 = vmul.f32 %v854, 0.17677669
        %v863 = vmax.f32 %v595, %v597
        %864 = vmax.xlane.f32.xlu0 %v863
        %v865 = vpop.xlane.xlu0 %864
        %v866 = vmax.f32 %v601, %v603
        %867 = vmax.xlane.f32.xlu0 %v866
        %v868 = vpop.xlane.xlu0 %867
        %v869 = vmax.f32 %v607, %v609
        %870 = vmax.xlane.f32.xlu0 %v869
        %v871 = vpop.xlane.xlu0 %870
        %v872 = vmax.f32 %v613, %v615
        %873 = vmax.xlane.f32.xlu0 %v872
        %v874 = vpop.xlane.xlu0 %873
        %v875 = vsub.f32 %v595, %v865
        %v876 = vsub.f32 %v597, %v865
        %v877 = vsub.f32 %v601, %v868
        %v878 = vsub.f32 %v603, %v868
        %v879 = vsub.f32 %v607, %v871
        %v880 = vsub.f32 %v609, %v871
        %v881 = vsub.f32 %v613, %v874
        %v882 = vsub.f32 %v615, %v874
        %v883 = vmul.f32 %v875, 1.442695
        %v884 = vpow.pop %v883
        %v885 = vmul.f32 %v876, 1.442695
        %v886 = vpow.pop %v885
        %v887 = vmul.f32 %v877, 1.442695
        %v888 = vpow.pop %v887
        %v889 = vmul.f32 %v878, 1.442695
        %v890 = vpow.pop %v889
        %v891 = vmul.f32 %v879, 1.442695
        %v892 = vpow.pop %v891
        %v893 = vmul.f32 %v880, 1.442695
        %v894 = vpow.pop %v893
        %v895 = vmul.f32 %v881, 1.442695
        %v896 = vpow.pop %v895
        %v897 = vmul.f32 %v882, 1.442695
        %v898 = vpow.pop %v897
        %v899 = vadd.f32 %v884, %v886
        %900 = vadd.xlane.f32.xlu0 %v899
        %v901 = vpop.xlane.xlu0 %900
        %v902 = vadd.f32 %v888, %v890
        %903 = vadd.xlane.f32.xlu0 %v902
        %v904 = vpop.xlane.xlu0 %903
        %v905 = vadd.f32 %v892, %v894
        %906 = vadd.xlane.f32.xlu0 %v905
        %v907 = vpop.xlane.xlu0 %906
        %v908 = vadd.f32 %v896, %v898
        %909 = vadd.xlane.f32.xlu0 %v908
        %v910 = vpop.xlane.xlu0 %909
        %v911 = vrcp.pop %v901
        %v912 = vmul.f32 %v884, %v911
        %v913 = vmul.f32 %v886, %v911
        %v914 = vrcp.pop %v904
        %v915 = vmul.f32 %v888, %v914
        %v916 = vmul.f32 %v890, %v914
        %v917 = vrcp.pop %v907
        %v918 = vmul.f32 %v892, %v917
        %v919 = vmul.f32 %v894, %v917
        %v920 = vrcp.pop %v910
        %v921 = vmul.f32 %v896, %v920
        %v922 = vmul.f32 %v898, %v920
        %923 = vmatprep.subr.mxu0 0.0
        %924 = vmatpush1.xpose.msra.mxu0 0.0
        %925 = vmatprep.subr.mxu0 0.0
        %926 = vmatpush1.xpose.msra.mxu0 0.0
        %927 = vmatprep.subr.mxu0 0.0
        %928 = vmatpush1.xpose.msra.mxu0 0.0
        %929 = vmatprep.subr.mxu0 0.0
        %930 = vmatpush1.xpose.msra.mxu0 0.0
        %931 = vmatprep.subr.mxu0 0.0
        %932 = vmatpush1.xpose.msra.mxu0 0.0
        %933 = vmatprep.subr.mxu0 0.0
        %934 = vmatpush1.xpose.msra.mxu0 0.0
        %935 = vmatprep.subr.mxu0 0.0
        %936 = vmatpush1.xpose.msra.mxu0 0.0
        %937 = vmatprep.subr.mxu0 0.0
        %938 = vmatpush1.xpose.msra.mxu0 0.0
        %939 = vmatprep.subr.mxu0 0.0
        %940 = vmatpush1.xpose.msra.mxu0 0.0
        %941 = vmatprep.subr.mxu0 0.0
        %942 = vmatpush1.xpose.msra.mxu0 0.0
        %943 = vmatprep.subr.mxu0 0.0
        %944 = vmatpush1.xpose.msra.mxu0 0.0
        %945 = vmatprep.subr.mxu0 0.0
        %946 = vmatpush1.xpose.msra.mxu0 0.0
        %947 = vmatprep.subr.mxu0 %v711
        %948 = vmatpush1.xpose.msra.mxu0 %v709
        %949 = vmatprep.subr.mxu0 %v705
        %950 = vmatpush1.xpose.msra.mxu0 %v703
        %951 = vmatprep.subr.mxu0 %v699
        %952 = vmatpush1.xpose.msra.mxu0 %v697
        %953 = vmatprep.subr.mxu0 %v693
        %954 = vmatpush1.xpose.msra.mxu0 %v691
        %955 = vmatprep.subr.mxu0 0.0
        %956 = vmatpush2.xpose.msra.mxu0 0.0
        %957 = vmatprep.subr.mxu0 0.0
        %958 = vmatpush2.xpose.msra.mxu0 0.0
        %959 = vmatprep.subr.mxu0 0.0
        %960 = vmatpush2.xpose.msra.mxu0 0.0
        %961 = vmatprep.subr.mxu0 0.0
        %962 = vmatpush2.xpose.msra.mxu0 0.0
        %963 = vmatprep.subr.mxu0 0.0
        %964 = vmatpush2.xpose.msra.mxu0 0.0
        %965 = vmatprep.subr.mxu0 0.0
        %966 = vmatpush2.xpose.msra.mxu0 0.0
        %967 = vmatprep.subr.mxu0 0.0
        %968 = vmatpush2.xpose.msra.mxu0 0.0
        %969 = vmatprep.subr.mxu0 0.0
        %970 = vmatpush2.xpose.msra.mxu0 0.0
        %971 = vmatprep.subr.mxu0 0.0
        %972 = vmatpush2.xpose.msra.mxu0 0.0
        %973 = vmatprep.subr.mxu0 0.0
        %974 = vmatpush2.xpose.msra.mxu0 0.0
        %975 = vmatprep.subr.mxu0 0.0
        %976 = vmatpush2.xpose.msra.mxu0 0.0
        %977 = vmatprep.subr.mxu0 0.0
        %978 = vmatpush2.xpose.msra.mxu0 0.0
        %979 = vmatprep.subr.mxu0 0.0
        %980 = vmatpush2.xpose.msra.mxu0 0.0
        %981 = vmatprep.subr.mxu0 0.0
        %982 = vmatpush2.xpose.msra.mxu0 0.0
        %983 = vmatprep.subr.mxu0 0.0
        %984 = vmatpush2.xpose.msra.mxu0 0.0
        %985 = vmatprep.subr.mxu0 0.0
        %986 = vmatpush2.xpose.msra.mxu0 0.0
        %987 = vmatprep.mubr.f32.mxu0 %v913
        %988 = vmatmul.mubr.f32.gmra.mxu0 %v912
        %v989 = vpop.f32.mrf.mxu0
        %v990 = vadd.f32 0.0, %v989
        %v991 = vpop.f32.mrf.mxu0
        %992 = vmatprep.mubr.f32.mxu0 %v916
        %993 = vmatmul.mubr.f32.gmra.mxu0 %v915
        %v994 = vpop.f32.mrf.mxu0
        %v995 = vadd.f32 0.0, %v994
        %v996 = vpop.f32.mrf.mxu0
        %997 = vmatprep.mubr.f32.mxu0 %v919
        %998 = vmatmul.mubr.f32.gmra.mxu0 %v918
        %v999 = vpop.f32.mrf.mxu0
        %v1000 = vadd.f32 0.0, %v999
        %v1001 = vpop.f32.mrf.mxu0
        %1002 = vmatprep.mubr.f32.mxu0 %v922
        %1003 = vmatmul.mubr.f32.gmra.mxu0 %v921
        %v1004 = vpop.f32.mrf.mxu0
        %v1005 = vadd.f32 0.0, %v1004
        %v1006 = vpop.f32.mrf.mxu0
        %1007 = vdwg.mxu0
        %1008 = vxpose.xlu0.b32.start [1/16] %v990, 128
        %1009 = vxpose.xlu0.b32.cont [2/16] %v995, 128
        %1010 = vxpose.xlu0.b32.cont [3/16] %v1000, 128
        %1011 = vxpose.xlu0.b32.cont [4/16] %v1005, 128
        %1012 = vxpose.xlu0.b32.cont [5/16] 0.0, 128
        %1013 = vxpose.xlu0.b32.cont [6/16] 0.0, 128
        %1014 = vxpose.xlu0.b32.cont [7/16] 0.0, 128
        %1015 = vxpose.xlu0.b32.cont [8/16] 0.0, 128
        %1016 = vxpose.xlu0.b32.cont [9/16] 0.0, 128
        %1017 = vxpose.xlu0.b32.cont [10/16] 0.0, 128
        %1018 = vxpose.xlu0.b32.cont [11/16] 0.0, 128
        %1019 = vxpose.xlu0.b32.cont [12/16] 0.0, 128
        %1020 = vxpose.xlu0.b32.cont [13/16] 0.0, 128
        %1021 = vxpose.xlu0.b32.cont [14/16] 0.0, 128
        %1022 = vxpose.xlu0.b32.cont [15/16] 0.0, 128
        %1023 = vxpose.xlu0.b32.end [16/16] 0.0, 128
        %v1024 = vpop.trf.xlu0
        %v1025 = vpop.trf.xlu0
        %v1026 = vpop.trf.xlu0
        %v1027 = vpop.trf.xlu0
        %v1028 = vpop.trf.xlu0
        %v1029 = vpop.trf.xlu0
        %v1030 = vpop.trf.xlu0
        %v1031 = vpop.trf.xlu0
        %v1032 = vpop.trf.xlu0
        %v1033 = vpop.trf.xlu0
        %v1034 = vpop.trf.xlu0
        %v1035 = vpop.trf.xlu0
        %v1036 = vpop.trf.xlu0
        %v1037 = vpop.trf.xlu0
        %v1038 = vpop.trf.xlu0
        %v1039 = vpop.trf.xlu0
        %vm1040 = vcmask 261120
        %v1042 = vsel %vm1040, %v1024, 0
        %v1045 = vsel %vm1040, %v1025, 0
        %v1048 = vsel %vm1040, %v1026, 0
        %v1051 = vsel %vm1040, %v1027, 0
        %1053 = vmatprep.subr.mxu0 0.0
        %1054 = vmatpush1.msra.mxu0 0.0
        %1055 = vmatprep.subr.mxu0 0.0
        %1056 = vmatpush1.msra.mxu0 0.0
        %1057 = vmatprep.subr.mxu0 0.0
        %1058 = vmatpush1.msra.mxu0 0.0
        %1059 = vmatprep.subr.mxu0 0.0
        %1060 = vmatpush1.msra.mxu0 0.0
        %1061 = vmatprep.subr.mxu0 0.0
        %1062 = vmatpush1.msra.mxu0 0.0
        %1063 = vmatprep.subr.mxu0 0.0
        %1064 = vmatpush1.msra.mxu0 0.0
        %1065 = vmatprep.subr.mxu0 0.0
        %1066 = vmatpush1.msra.mxu0 0.0
        %1067 = vmatprep.subr.mxu0 0.0
        %1068 = vmatpush1.msra.mxu0 0.0
        %1069 = vmatprep.subr.mxu0 0.0
        %1070 = vmatpush1.msra.mxu0 0.0
        %1071 = vmatprep.subr.mxu0 0.0
        %1072 = vmatpush1.msra.mxu0 0.0
        %1073 = vmatprep.subr.mxu0 0.0
        %1074 = vmatpush1.msra.mxu0 0.0
        %1075 = vmatprep.subr.mxu0 0.0
        %1076 = vmatpush1.msra.mxu0 0.0
        %1077 = vmatprep.subr.mxu0 %v862
        %1078 = vmatpush1.msra.mxu0 %v861
        %1079 = vmatprep.subr.mxu0 %v860
        %1080 = vmatpush1.msra.mxu0 %v859
        %1081 = vmatprep.subr.mxu0 %v858
        %1082 = vmatpush1.msra.mxu0 %v857
        %1083 = vmatprep.subr.mxu0 %v856
        %1084 = vmatpush1.msra.mxu0 %v855
        %1085 = vmatprep.subr.mxu0 0.0
        %1086 = vmatpush2.msra.mxu0 0.0
        %1087 = vmatprep.subr.mxu0 0.0
        %1088 = vmatpush2.msra.mxu0 0.0
        %1089 = vmatprep.subr.mxu0 0.0
        %1090 = vmatpush2.msra.mxu0 0.0
        %1091 = vmatprep.subr.mxu0 0.0
        %1092 = vmatpush2.msra.mxu0 0.0
        %1093 = vmatprep.subr.mxu0 0.0
        %1094 = vmatpush2.msra.mxu0 0.0
        %1095 = vmatprep.subr.mxu0 0.0
        %1096 = vmatpush2.msra.mxu0 0.0
        %1097 = vmatprep.subr.mxu0 0.0
        %1098 = vmatpush2.msra.mxu0 0.0
        %1099 = vmatprep.subr.mxu0 0.0
        %1100 = vmatpush2.msra.mxu0 0.0
        %1101 = vmatprep.subr.mxu0 0.0
        %1102 = vmatpush2.msra.mxu0 0.0
        %1103 = vmatprep.subr.mxu0 0.0
        %1104 = vmatpush2.msra.mxu0 0.0
        %1105 = vmatprep.subr.mxu0 0.0
        %1106 = vmatpush2.msra.mxu0 0.0
        %1107 = vmatprep.subr.mxu0 0.0
        %1108 = vmatpush2.msra.mxu0 0.0
        %1109 = vmatprep.subr.mxu0 0.0
        %1110 = vmatpush2.msra.mxu0 0.0
        %1111 = vmatprep.subr.mxu0 0.0
        %1112 = vmatpush2.msra.mxu0 0.0
        %1113 = vmatprep.subr.mxu0 0.0
        %1114 = vmatpush2.msra.mxu0 0.0
        %1115 = vmatprep.subr.mxu0 0.0
        %1116 = vmatpush2.msra.mxu0 0.0
        %1117 = vmatprep.mubr.f32.mxu0 0.0
        %1118 = vmatmul.mubr.f32.gmra.mxu0 %v1042
        %v1119 = vpop.f32.mrf.mxu0
        %v1120 = vadd.f32 0.0, %v1119
        %v1121 = vpop.f32.mrf.mxu0
        %v1122 = vadd.f32 0.0, %v1121
        %1123 = vmatprep.mubr.f32.mxu0 0.0
        %1124 = vmatmul.mubr.f32.gmra.mxu0 %v1045
        %v1125 = vpop.f32.mrf.mxu0
        %v1126 = vadd.f32 0.0, %v1125
        %v1127 = vpop.f32.mrf.mxu0
        %v1128 = vadd.f32 0.0, %v1127
        %1129 = vmatprep.mubr.f32.mxu0 0.0
        %1130 = vmatmul.mubr.f32.gmra.mxu0 %v1048
        %v1131 = vpop.f32.mrf.mxu0
        %v1132 = vadd.f32 0.0, %v1131
        %v1133 = vpop.f32.mrf.mxu0
        %v1134 = vadd.f32 0.0, %v1133
        %1135 = vmatprep.mubr.f32.mxu0 0.0
        %1136 = vmatmul.mubr.f32.gmra.mxu0 %v1051
        %v1137 = vpop.f32.mrf.mxu0
        %v1138 = vadd.f32 0.0, %v1137
        %v1139 = vpop.f32.mrf.mxu0
        %v1140 = vadd.f32 0.0, %v1139
        %1141 = vdwg.mxu0
        %v1142 = vmax.f32 %v523, %v535
        %v1143 = vmax.f32 %v529, %v541
        %v1144 = vmax.f32 %v1142, %v1143
        %v1145 = vrot.slane %v1144, 4
        %v1146 = vmax.f32 %v1144, %v1145
        %v1147 = vrot.slane %v1146, 2
        %v1148 = vmax.f32 %v1146, %v1147
        %v1149 = vrot.slane %v1148, 1
        %v1150 = vmax.f32 %v1148, %v1149
        %v1151 = vmax.f32 %v525, %v537
        %v1152 = vmax.f32 %v531, %v543
        %v1153 = vmax.f32 %v1151, %v1152
        %v1154 = vrot.slane %v1153, 4
        %v1155 = vmax.f32 %v1153, %v1154
        %v1156 = vrot.slane %v1155, 2
        %v1157 = vmax.f32 %v1155, %v1156
        %v1158 = vrot.slane %v1157, 1
        %v1159 = vmax.f32 %v1157, %v1158
        %v1160 = vsub.f32 %v523, %v1150
        %v1161 = vsub.f32 %v525, %v1159
        %v1162 = vsub.f32 %v529, %v1150
        %v1163 = vsub.f32 %v531, %v1159
        %v1164 = vsub.f32 %v535, %v1150
        %v1165 = vsub.f32 %v537, %v1159
        %v1166 = vsub.f32 %v541, %v1150
        %v1167 = vsub.f32 %v543, %v1159
        %v1168 = vmul.f32 %v1160, 1.442695
        %v1169 = vpow.pop %v1168
        %v1170 = vmul.f32 %v1161, 1.442695
        %v1171 = vpow.pop %v1170
        %v1172 = vmul.f32 %v1162, 1.442695
        %v1173 = vpow.pop %v1172
        %v1174 = vmul.f32 %v1163, 1.442695
        %v1175 = vpow.pop %v1174
        %v1176 = vmul.f32 %v1164, 1.442695
        %v1177 = vpow.pop %v1176
        %v1178 = vmul.f32 %v1165, 1.442695
        %v1179 = vpow.pop %v1178
        %v1180 = vmul.f32 %v1166, 1.442695
        %v1181 = vpow.pop %v1180
        %v1182 = vmul.f32 %v1167, 1.442695
        %v1183 = vpow.pop %v1182
        %v1184 = vadd.f32 %v1169, %v1173
        %v1185 = vadd.f32 %v1184, %v1177
        %v1186 = vadd.f32 %v1185, %v1181
        %v1187 = vrot.slane %v1186, 4
        %v1188 = vadd.f32 %v1186, %v1187
        %v1189 = vrot.slane %v1188, 2
        %v1190 = vadd.f32 %v1188, %v1189
        %v1191 = vrot.slane %v1190, 1
        %v1192 = vadd.f32 %v1190, %v1191
        %v1193 = vadd.f32 %v1171, %v1175
        %v1194 = vadd.f32 %v1193, %v1179
        %v1195 = vadd.f32 %v1194, %v1183
        %v1196 = vrot.slane %v1195, 4
        %v1197 = vadd.f32 %v1195, %v1196
        %v1198 = vrot.slane %v1197, 2
        %v1199 = vadd.f32 %v1197, %v1198
        %v1200 = vrot.slane %v1199, 1
        %v1201 = vadd.f32 %v1199, %v1200
        %v1202 = vrcp.pop %v1192
        %v1203 = vmul.f32 %v1169, %v1202
        %v1204 = vrcp.pop %v1201
        %v1205 = vmul.f32 %v1171, %v1204
        %v1206 = vmul.f32 %v1173, %v1202
        %v1207 = vmul.f32 %v1175, %v1204
        %v1208 = vmul.f32 %v1177, %v1202
        %v1209 = vmul.f32 %v1179, %v1204
        %v1210 = vmul.f32 %v1181, %v1202
        %v1211 = vmul.f32 %v1183, %v1204
        %v1212 = vmul.f32 %v1203, 0.17677669
        %v1213 = vmul.f32 %v1205, 0.17677669
        %v1214 = vmul.f32 %v1206, 0.17677669
        %v1215 = vmul.f32 %v1207, 0.17677669
        %v1216 = vmul.f32 %v1208, 0.17677669
        %v1217 = vmul.f32 %v1209, 0.17677669
        %v1218 = vmul.f32 %v1210, 0.17677669
        %v1219 = vmul.f32 %v1211, 0.17677669
        %v1220 = vmax.f32 %v619, %v621
        %1221 = vmax.xlane.f32.xlu0 %v1220
        %v1222 = vpop.xlane.xlu0 %1221
        %v1223 = vmax.f32 %v625, %v627
        %1224 = vmax.xlane.f32.xlu0 %v1223
        %v1225 = vpop.xlane.xlu0 %1224
        %v1226 = vmax.f32 %v631, %v633
        %1227 = vmax.xlane.f32.xlu0 %v1226
        %v1228 = vpop.xlane.xlu0 %1227
        %v1229 = vmax.f32 %v637, %v639
        %1230 = vmax.xlane.f32.xlu0 %v1229
        %v1231 = vpop.xlane.xlu0 %1230
        %v1232 = vsub.f32 %v619, %v1222
        %v1233 = vsub.f32 %v621, %v1222
        %v1234 = vsub.f32 %v625, %v1225
        %v1235 = vsub.f32 %v627, %v1225
        %v1236 = vsub.f32 %v631, %v1228
        %v1237 = vsub.f32 %v633, %v1228
        %v1238 = vsub.f32 %v637, %v1231
        %v1239 = vsub.f32 %v639, %v1231
        %v1240 = vmul.f32 %v1232, 1.442695
        %v1241 = vpow.pop %v1240
        %v1242 = vmul.f32 %v1233, 1.442695
        %v1243 = vpow.pop %v1242
        %v1244 = vmul.f32 %v1234, 1.442695
        %v1245 = vpow.pop %v1244
        %v1246 = vmul.f32 %v1235, 1.442695
        %v1247 = vpow.pop %v1246
        %v1248 = vmul.f32 %v1236, 1.442695
        %v1249 = vpow.pop %v1248
        %v1250 = vmul.f32 %v1237, 1.442695
        %v1251 = vpow.pop %v1250
        %v1252 = vmul.f32 %v1238, 1.442695
        %v1253 = vpow.pop %v1252
        %v1254 = vmul.f32 %v1239, 1.442695
        %v1255 = vpow.pop %v1254
        %v1256 = vadd.f32 %v1241, %v1243
        %1257 = vadd.xlane.f32.xlu0 %v1256
        %v1258 = vpop.xlane.xlu0 %1257
        %v1259 = vadd.f32 %v1245, %v1247
        %1260 = vadd.xlane.f32.xlu0 %v1259
        %v1261 = vpop.xlane.xlu0 %1260
        %v1262 = vadd.f32 %v1249, %v1251
        %1263 = vadd.xlane.f32.xlu0 %v1262
        %v1264 = vpop.xlane.xlu0 %1263
        %v1265 = vadd.f32 %v1253, %v1255
        %1266 = vadd.xlane.f32.xlu0 %v1265
        %v1267 = vpop.xlane.xlu0 %1266
        %v1268 = vrcp.pop %v1258
        %v1269 = vmul.f32 %v1241, %v1268
        %v1270 = vmul.f32 %v1243, %v1268
        %v1271 = vrcp.pop %v1261
        %v1272 = vmul.f32 %v1245, %v1271
        %v1273 = vmul.f32 %v1247, %v1271
        %v1274 = vrcp.pop %v1264
        %v1275 = vmul.f32 %v1249, %v1274
        %v1276 = vmul.f32 %v1251, %v1274
        %v1277 = vrcp.pop %v1267
        %v1278 = vmul.f32 %v1253, %v1277
        %v1279 = vmul.f32 %v1255, %v1277
        %1280 = vmatprep.subr.mxu0 0.0
        %1281 = vmatpush1.xpose.msra.mxu0 0.0
        %1282 = vmatprep.subr.mxu0 0.0
        %1283 = vmatpush1.xpose.msra.mxu0 0.0
        %1284 = vmatprep.subr.mxu0 0.0
        %1285 = vmatpush1.xpose.msra.mxu0 0.0
        %1286 = vmatprep.subr.mxu0 0.0
        %1287 = vmatpush1.xpose.msra.mxu0 0.0
        %1288 = vmatprep.subr.mxu0 0.0
        %1289 = vmatpush1.xpose.msra.mxu0 0.0
        %1290 = vmatprep.subr.mxu0 0.0
        %1291 = vmatpush1.xpose.msra.mxu0 0.0
        %1292 = vmatprep.subr.mxu0 0.0
        %1293 = vmatpush1.xpose.msra.mxu0 0.0
        %1294 = vmatprep.subr.mxu0 0.0
        %1295 = vmatpush1.xpose.msra.mxu0 0.0
        %1296 = vmatprep.subr.mxu0 0.0
        %1297 = vmatpush1.xpose.msra.mxu0 0.0
        %1298 = vmatprep.subr.mxu0 0.0
        %1299 = vmatpush1.xpose.msra.mxu0 0.0
        %1300 = vmatprep.subr.mxu0 0.0
        %1301 = vmatpush1.xpose.msra.mxu0 0.0
        %1302 = vmatprep.subr.mxu0 0.0
        %1303 = vmatpush1.xpose.msra.mxu0 0.0
        %1304 = vmatprep.subr.mxu0 %v735
        %1305 = vmatpush1.xpose.msra.mxu0 %v733
        %1306 = vmatprep.subr.mxu0 %v729
        %1307 = vmatpush1.xpose.msra.mxu0 %v727
        %1308 = vmatprep.subr.mxu0 %v723
        %1309 = vmatpush1.xpose.msra.mxu0 %v721
        %1310 = vmatprep.subr.mxu0 %v717
        %1311 = vmatpush1.xpose.msra.mxu0 %v715
        %1312 = vmatprep.subr.mxu0 0.0
        %1313 = vmatpush2.xpose.msra.mxu0 0.0
        %1314 = vmatprep.subr.mxu0 0.0
        %1315 = vmatpush2.xpose.msra.mxu0 0.0
        %1316 = vmatprep.subr.mxu0 0.0
        %1317 = vmatpush2.xpose.msra.mxu0 0.0
        %1318 = vmatprep.subr.mxu0 0.0
        %1319 = vmatpush2.xpose.msra.mxu0 0.0
        %1320 = vmatprep.subr.mxu0 0.0
        %1321 = vmatpush2.xpose.msra.mxu0 0.0
        %1322 = vmatprep.subr.mxu0 0.0
        %1323 = vmatpush2.xpose.msra.mxu0 0.0
        %1324 = vmatprep.subr.mxu0 0.0
        %1325 = vmatpush2.xpose.msra.mxu0 0.0
        %1326 = vmatprep.subr.mxu0 0.0
        %1327 = vmatpush2.xpose.msra.mxu0 0.0
        %1328 = vmatprep.subr.mxu0 0.0
        %1329 = vmatpush2.xpose.msra.mxu0 0.0
        %1330 = vmatprep.subr.mxu0 0.0
        %1331 = vmatpush2.xpose.msra.mxu0 0.0
        %1332 = vmatprep.subr.mxu0 0.0
        %1333 = vmatpush2.xpose.msra.mxu0 0.0
        %1334 = vmatprep.subr.mxu0 0.0
        %1335 = vmatpush2.xpose.msra.mxu0 0.0
        %1336 = vmatprep.subr.mxu0 0.0
        %1337 = vmatpush2.xpose.msra.mxu0 0.0
        %1338 = vmatprep.subr.mxu0 0.0
        %1339 = vmatpush2.xpose.msra.mxu0 0.0
        %1340 = vmatprep.subr.mxu0 0.0
        %1341 = vmatpush2.xpose.msra.mxu0 0.0
        %1342 = vmatprep.subr.mxu0 0.0
        %1343 = vmatpush2.xpose.msra.mxu0 0.0
        %1344 = vmatprep.mubr.f32.mxu0 %v1270
        %1345 = vmatmul.mubr.f32.gmra.mxu0 %v1269
        %v1346 = vpop.f32.mrf.mxu0
        %v1347 = vadd.f32 0.0, %v1346
        %v1348 = vpop.f32.mrf.mxu0
        %1349 = vmatprep.mubr.f32.mxu0 %v1273
        %1350 = vmatmul.mubr.f32.gmra.mxu0 %v1272
        %v1351 = vpop.f32.mrf.mxu0
        %v1352 = vadd.f32 0.0, %v1351
        %v1353 = vpop.f32.mrf.mxu0
        %1354 = vmatprep.mubr.f32.mxu0 %v1276
        %1355 = vmatmul.mubr.f32.gmra.mxu0 %v1275
        %v1356 = vpop.f32.mrf.mxu0
        %v1357 = vadd.f32 0.0, %v1356
        %v1358 = vpop.f32.mrf.mxu0
        %1359 = vmatprep.mubr.f32.mxu0 %v1279
        %1360 = vmatmul.mubr.f32.gmra.mxu0 %v1278
        %v1361 = vpop.f32.mrf.mxu0
        %v1362 = vadd.f32 0.0, %v1361
        %v1363 = vpop.f32.mrf.mxu0
        %1364 = vdwg.mxu0
        %1365 = vxpose.xlu0.b32.start [1/16] %v1347, 128
        %1366 = vxpose.xlu0.b32.cont [2/16] %v1352, 128
        %1367 = vxpose.xlu0.b32.cont [3/16] %v1357, 128
        %1368 = vxpose.xlu0.b32.cont [4/16] %v1362, 128
        %1369 = vxpose.xlu0.b32.cont [5/16] 0.0, 128
        %1370 = vxpose.xlu0.b32.cont [6/16] 0.0, 128
        %1371 = vxpose.xlu0.b32.cont [7/16] 0.0, 128
        %1372 = vxpose.xlu0.b32.cont [8/16] 0.0, 128
        %1373 = vxpose.xlu0.b32.cont [9/16] 0.0, 128
        %1374 = vxpose.xlu0.b32.cont [10/16] 0.0, 128
        %1375 = vxpose.xlu0.b32.cont [11/16] 0.0, 128
        %1376 = vxpose.xlu0.b32.cont [12/16] 0.0, 128
        %1377 = vxpose.xlu0.b32.cont [13/16] 0.0, 128
        %1378 = vxpose.xlu0.b32.cont [14/16] 0.0, 128
        %1379 = vxpose.xlu0.b32.cont [15/16] 0.0, 128
        %1380 = vxpose.xlu0.b32.end [16/16] 0.0, 128
        %v1381 = vpop.trf.xlu0
        %v1382 = vpop.trf.xlu0
        %v1383 = vpop.trf.xlu0
        %v1384 = vpop.trf.xlu0
        %v1385 = vpop.trf.xlu0
        %v1386 = vpop.trf.xlu0
        %v1387 = vpop.trf.xlu0
        %v1388 = vpop.trf.xlu0
        %v1389 = vpop.trf.xlu0
        %v1390 = vpop.trf.xlu0
        %v1391 = vpop.trf.xlu0
        %v1392 = vpop.trf.xlu0
        %v1393 = vpop.trf.xlu0
        %v1394 = vpop.trf.xlu0
        %v1395 = vpop.trf.xlu0
        %v1396 = vpop.trf.xlu0
        %v1398 = vsel %vm1040, %v1381, 0
        %v1401 = vsel %vm1040, %v1382, 0
        %v1404 = vsel %vm1040, %v1383, 0
        %v1407 = vsel %vm1040, %v1384, 0
        %1409 = vmatprep.subr.mxu0 0.0
        %1410 = vmatpush1.msra.mxu0 0.0
        %1411 = vmatprep.subr.mxu0 0.0
        %1412 = vmatpush1.msra.mxu0 0.0
        %1413 = vmatprep.subr.mxu0 0.0
        %1414 = vmatpush1.msra.mxu0 0.0
        %1415 = vmatprep.subr.mxu0 0.0
        %1416 = vmatpush1.msra.mxu0 0.0
        %1417 = vmatprep.subr.mxu0 0.0
        %1418 = vmatpush1.msra.mxu0 0.0
        %1419 = vmatprep.subr.mxu0 0.0
        %1420 = vmatpush1.msra.mxu0 0.0
        %1421 = vmatprep.subr.mxu0 0.0
        %1422 = vmatpush1.msra.mxu0 0.0
        %1423 = vmatprep.subr.mxu0 0.0
        %1424 = vmatpush1.msra.mxu0 0.0
        %1425 = vmatprep.subr.mxu0 0.0
        %1426 = vmatpush1.msra.mxu0 0.0
        %1427 = vmatprep.subr.mxu0 0.0
        %1428 = vmatpush1.msra.mxu0 0.0
        %1429 = vmatprep.subr.mxu0 0.0
        %1430 = vmatpush1.msra.mxu0 0.0
        %1431 = vmatprep.subr.mxu0 0.0
        %1432 = vmatpush1.msra.mxu0 0.0
        %1433 = vmatprep.subr.mxu0 %v1219
        %1434 = vmatpush1.msra.mxu0 %v1218
        %1435 = vmatprep.subr.mxu0 %v1217
        %1436 = vmatpush1.msra.mxu0 %v1216
        %1437 = vmatprep.subr.mxu0 %v1215
        %1438 = vmatpush1.msra.mxu0 %v1214
        %1439 = vmatprep.subr.mxu0 %v1213
        %1440 = vmatpush1.msra.mxu0 %v1212
        %1441 = vmatprep.subr.mxu0 0.0
        %1442 = vmatpush2.msra.mxu0 0.0
        %1443 = vmatprep.subr.mxu0 0.0
        %1444 = vmatpush2.msra.mxu0 0.0
        %1445 = vmatprep.subr.mxu0 0.0
        %1446 = vmatpush2.msra.mxu0 0.0
        %1447 = vmatprep.subr.mxu0 0.0
        %1448 = vmatpush2.msra.mxu0 0.0
        %1449 = vmatprep.subr.mxu0 0.0
        %1450 = vmatpush2.msra.mxu0 0.0
        %1451 = vmatprep.subr.mxu0 0.0
        %1452 = vmatpush2.msra.mxu0 0.0
        %1453 = vmatprep.subr.mxu0 0.0
        %1454 = vmatpush2.msra.mxu0 0.0
        %1455 = vmatprep.subr.mxu0 0.0
        %1456 = vmatpush2.msra.mxu0 0.0
        %1457 = vmatprep.subr.mxu0 0.0
        %1458 = vmatpush2.msra.mxu0 0.0
        %1459 = vmatprep.subr.mxu0 0.0
        %1460 = vmatpush2.msra.mxu0 0.0
        %1461 = vmatprep.subr.mxu0 0.0
        %1462 = vmatpush2.msra.mxu0 0.0
        %1463 = vmatprep.subr.mxu0 0.0
        %1464 = vmatpush2.msra.mxu0 0.0
        %1465 = vmatprep.subr.mxu0 0.0
        %1466 = vmatpush2.msra.mxu0 0.0
        %1467 = vmatprep.subr.mxu0 0.0
        %1468 = vmatpush2.msra.mxu0 0.0
        %1469 = vmatprep.subr.mxu0 0.0
        %1470 = vmatpush2.msra.mxu0 0.0
        %1471 = vmatprep.subr.mxu0 0.0
        %1472 = vmatpush2.msra.mxu0 0.0
        %1473 = vmatprep.mubr.f32.mxu0 0.0
        %1474 = vmatmul.mubr.f32.gmra.mxu0 %v1398
        %v1475 = vpop.f32.mrf.mxu0
        %v1476 = vadd.f32 0.0, %v1475
        %v1477 = vpop.f32.mrf.mxu0
        %v1478 = vadd.f32 0.0, %v1477
        %1479 = vmatprep.mubr.f32.mxu0 0.0
        %1480 = vmatmul.mubr.f32.gmra.mxu0 %v1401
        %v1481 = vpop.f32.mrf.mxu0
        %v1482 = vadd.f32 0.0, %v1481
        %v1483 = vpop.f32.mrf.mxu0
        %v1484 = vadd.f32 0.0, %v1483
        %1485 = vmatprep.mubr.f32.mxu0 0.0
        %1486 = vmatmul.mubr.f32.gmra.mxu0 %v1404
        %v1487 = vpop.f32.mrf.mxu0
        %v1488 = vadd.f32 0.0, %v1487
        %v1489 = vpop.f32.mrf.mxu0
        %v1490 = vadd.f32 0.0, %v1489
        %1491 = vmatprep.mubr.f32.mxu0 0.0
        %1492 = vmatmul.mubr.f32.gmra.mxu0 %v1407
        %v1493 = vpop.f32.mrf.mxu0
        %v1494 = vadd.f32 0.0, %v1493
        %v1495 = vpop.f32.mrf.mxu0
        %v1496 = vadd.f32 0.0, %v1495
        %1497 = vdwg.mxu0
        %v1498 = vmax.f32 %v547, %v559
        %v1499 = vmax.f32 %v553, %v565
        %v1500 = vmax.f32 %v1498, %v1499
        %v1501 = vrot.slane %v1500, 4
        %v1502 = vmax.f32 %v1500, %v1501
        %v1503 = vrot.slane %v1502, 2
        %v1504 = vmax.f32 %v1502, %v1503
        %v1505 = vrot.slane %v1504, 1
        %v1506 = vmax.f32 %v1504, %v1505
        %v1507 = vmax.f32 %v549, %v561
        %v1508 = vmax.f32 %v555, %v567
        %v1509 = vmax.f32 %v1507, %v1508
        %v1510 = vrot.slane %v1509, 4
        %v1511 = vmax.f32 %v1509, %v1510
        %v1512 = vrot.slane %v1511, 2
        %v1513 = vmax.f32 %v1511, %v1512
        %v1514 = vrot.slane %v1513, 1
        %v1515 = vmax.f32 %v1513, %v1514
        %v1516 = vsub.f32 %v547, %v1506
        %v1517 = vsub.f32 %v549, %v1515
        %v1518 = vsub.f32 %v553, %v1506
        %v1519 = vsub.f32 %v555, %v1515
        %v1520 = vsub.f32 %v559, %v1506
        %v1521 = vsub.f32 %v561, %v1515
        %v1522 = vsub.f32 %v565, %v1506
        %v1523 = vsub.f32 %v567, %v1515
        %v1524 = vmul.f32 %v1516, 1.442695
        %v1525 = vpow.pop %v1524
        %v1526 = vmul.f32 %v1517, 1.442695
        %v1527 = vpow.pop %v1526
        %v1528 = vmul.f32 %v1518, 1.442695
        %v1529 = vpow.pop %v1528
        %v1530 = vmul.f32 %v1519, 1.442695
        %v1531 = vpow.pop %v1530
        %v1532 = vmul.f32 %v1520, 1.442695
        %v1533 = vpow.pop %v1532
        %v1534 = vmul.f32 %v1521, 1.442695
        %v1535 = vpow.pop %v1534
        %v1536 = vmul.f32 %v1522, 1.442695
        %v1537 = vpow.pop %v1536
        %v1538 = vmul.f32 %v1523, 1.442695
        %v1539 = vpow.pop %v1538
        %v1540 = vadd.f32 %v1525, %v1529
        %v1541 = vadd.f32 %v1540, %v1533
        %v1542 = vadd.f32 %v1541, %v1537
        %v1543 = vrot.slane %v1542, 4
        %v1544 = vadd.f32 %v1542, %v1543
        %v1545 = vrot.slane %v1544, 2
        %v1546 = vadd.f32 %v1544, %v1545
        %v1547 = vrot.slane %v1546, 1
        %v1548 = vadd.f32 %v1546, %v1547
        %v1549 = vadd.f32 %v1527, %v1531
        %v1550 = vadd.f32 %v1549, %v1535
        %v1551 = vadd.f32 %v1550, %v1539
        %v1552 = vrot.slane %v1551, 4
        %v1553 = vadd.f32 %v1551, %v1552
        %v1554 = vrot.slane %v1553, 2
        %v1555 = vadd.f32 %v1553, %v1554
        %v1556 = vrot.slane %v1555, 1
        %v1557 = vadd.f32 %v1555, %v1556
        %v1558 = vrcp.pop %v1548
        %v1559 = vmul.f32 %v1525, %v1558
        %v1560 = vrcp.pop %v1557
        %v1561 = vmul.f32 %v1527, %v1560
        %v1562 = vmul.f32 %v1529, %v1558
        %v1563 = vmul.f32 %v1531, %v1560
        %v1564 = vmul.f32 %v1533, %v1558
        %v1565 = vmul.f32 %v1535, %v1560
        %v1566 = vmul.f32 %v1537, %v1558
        %v1567 = vmul.f32 %v1539, %v1560
        %v1568 = vmul.f32 %v1559, 0.17677669
        %v1569 = vmul.f32 %v1561, 0.17677669
        %v1570 = vmul.f32 %v1562, 0.17677669
        %v1571 = vmul.f32 %v1563, 0.17677669
        %v1572 = vmul.f32 %v1564, 0.17677669
        %v1573 = vmul.f32 %v1565, 0.17677669
        %v1574 = vmul.f32 %v1566, 0.17677669
        %v1575 = vmul.f32 %v1567, 0.17677669
        %v1576 = vmax.f32 %v643, %v645
        %1577 = vmax.xlane.f32.xlu0 %v1576
        %v1578 = vpop.xlane.xlu0 %1577
        %v1579 = vmax.f32 %v649, %v651
        %1580 = vmax.xlane.f32.xlu0 %v1579
        %v1581 = vpop.xlane.xlu0 %1580
        %v1582 = vmax.f32 %v655, %v657
        %1583 = vmax.xlane.f32.xlu0 %v1582
        %v1584 = vpop.xlane.xlu0 %1583
        %v1585 = vmax.f32 %v661, %v663
        %1586 = vmax.xlane.f32.xlu0 %v1585
        %v1587 = vpop.xlane.xlu0 %1586
        %v1588 = vsub.f32 %v643, %v1578
        %v1589 = vsub.f32 %v645, %v1578
        %v1590 = vsub.f32 %v649, %v1581
        %v1591 = vsub.f32 %v651, %v1581
        %v1592 = vsub.f32 %v655, %v1584
        %v1593 = vsub.f32 %v657, %v1584
        %v1594 = vsub.f32 %v661, %v1587
        %v1595 = vsub.f32 %v663, %v1587
        %v1596 = vmul.f32 %v1588, 1.442695
        %v1597 = vpow.pop %v1596
        %v1598 = vmul.f32 %v1589, 1.442695
        %v1599 = vpow.pop %v1598
        %v1600 = vmul.f32 %v1590, 1.442695
        %v1601 = vpow.pop %v1600
        %v1602 = vmul.f32 %v1591, 1.442695
        %v1603 = vpow.pop %v1602
        %v1604 = vmul.f32 %v1592, 1.442695
        %v1605 = vpow.pop %v1604
        %v1606 = vmul.f32 %v1593, 1.442695
        %v1607 = vpow.pop %v1606
        %v1608 = vmul.f32 %v1594, 1.442695
        %v1609 = vpow.pop %v1608
        %v1610 = vmul.f32 %v1595, 1.442695
        %v1611 = vpow.pop %v1610
        %v1612 = vadd.f32 %v1597, %v1599
        %1613 = vadd.xlane.f32.xlu0 %v1612
        %v1614 = vpop.xlane.xlu0 %1613
        %v1615 = vadd.f32 %v1601, %v1603
        %1616 = vadd.xlane.f32.xlu0 %v1615
        %v1617 = vpop.xlane.xlu0 %1616
        %v1618 = vadd.f32 %v1605, %v1607
        %1619 = vadd.xlane.f32.xlu0 %v1618
        %v1620 = vpop.xlane.xlu0 %1619
        %v1621 = vadd.f32 %v1609, %v1611
        %1622 = vadd.xlane.f32.xlu0 %v1621
        %v1623 = vpop.xlane.xlu0 %1622
        %v1624 = vrcp.pop %v1614
        %v1625 = vmul.f32 %v1597, %v1624
        %v1626 = vmul.f32 %v1599, %v1624
        %v1627 = vrcp.pop %v1617
        %v1628 = vmul.f32 %v1601, %v1627
        %v1629 = vmul.f32 %v1603, %v1627
        %v1630 = vrcp.pop %v1620
        %v1631 = vmul.f32 %v1605, %v1630
        %v1632 = vmul.f32 %v1607, %v1630
        %v1633 = vrcp.pop %v1623
        %v1634 = vmul.f32 %v1609, %v1633
        %v1635 = vmul.f32 %v1611, %v1633
        %1636 = vmatprep.subr.mxu0 0.0
        %1637 = vmatpush1.xpose.msra.mxu0 0.0
        %1638 = vmatprep.subr.mxu0 0.0
        %1639 = vmatpush1.xpose.msra.mxu0 0.0
        %1640 = vmatprep.subr.mxu0 0.0
        %1641 = vmatpush1.xpose.msra.mxu0 0.0
        %1642 = vmatprep.subr.mxu0 0.0
        %1643 = vmatpush1.xpose.msra.mxu0 0.0
        %1644 = vmatprep.subr.mxu0 0.0
        %1645 = vmatpush1.xpose.msra.mxu0 0.0
        %1646 = vmatprep.subr.mxu0 0.0
        %1647 = vmatpush1.xpose.msra.mxu0 0.0
        %1648 = vmatprep.subr.mxu0 0.0
        %1649 = vmatpush1.xpose.msra.mxu0 0.0
        %1650 = vmatprep.subr.mxu0 0.0
        %1651 = vmatpush1.xpose.msra.mxu0 0.0
        %1652 = vmatprep.subr.mxu0 0.0
        %1653 = vmatpush1.xpose.msra.mxu0 0.0
        %1654 = vmatprep.subr.mxu0 0.0
        %1655 = vmatpush1.xpose.msra.mxu0 0.0
        %1656 = vmatprep.subr.mxu0 0.0
        %1657 = vmatpush1.xpose.msra.mxu0 0.0
        %1658 = vmatprep.subr.mxu0 0.0
        %1659 = vmatpush1.xpose.msra.mxu0 0.0
        %1660 = vmatprep.subr.mxu0 %v759
        %1661 = vmatpush1.xpose.msra.mxu0 %v757
        %1662 = vmatprep.subr.mxu0 %v753
        %1663 = vmatpush1.xpose.msra.mxu0 %v751
        %1664 = vmatprep.subr.mxu0 %v747
        %1665 = vmatpush1.xpose.msra.mxu0 %v745
        %1666 = vmatprep.subr.mxu0 %v741
        %1667 = vmatpush1.xpose.msra.mxu0 %v739
        %1668 = vmatprep.subr.mxu0 0.0
        %1669 = vmatpush2.xpose.msra.mxu0 0.0
        %1670 = vmatprep.subr.mxu0 0.0
        %1671 = vmatpush2.xpose.msra.mxu0 0.0
        %1672 = vmatprep.subr.mxu0 0.0
        %1673 = vmatpush2.xpose.msra.mxu0 0.0
        %1674 = vmatprep.subr.mxu0 0.0
        %1675 = vmatpush2.xpose.msra.mxu0 0.0
        %1676 = vmatprep.subr.mxu0 0.0
        %1677 = vmatpush2.xpose.msra.mxu0 0.0
        %1678 = vmatprep.subr.mxu0 0.0
        %1679 = vmatpush2.xpose.msra.mxu0 0.0
        %1680 = vmatprep.subr.mxu0 0.0
        %1681 = vmatpush2.xpose.msra.mxu0 0.0
        %1682 = vmatprep.subr.mxu0 0.0
        %1683 = vmatpush2.xpose.msra.mxu0 0.0
        %1684 = vmatprep.subr.mxu0 0.0
        %1685 = vmatpush2.xpose.msra.mxu0 0.0
        %1686 = vmatprep.subr.mxu0 0.0
        %1687 = vmatpush2.xpose.msra.mxu0 0.0
        %1688 = vmatprep.subr.mxu0 0.0
        %1689 = vmatpush2.xpose.msra.mxu0 0.0
        %1690 = vmatprep.subr.mxu0 0.0
        %1691 = vmatpush2.xpose.msra.mxu0 0.0
        %1692 = vmatprep.subr.mxu0 0.0
        %1693 = vmatpush2.xpose.msra.mxu0 0.0
        %1694 = vmatprep.subr.mxu0 0.0
        %1695 = vmatpush2.xpose.msra.mxu0 0.0
        %1696 = vmatprep.subr.mxu0 0.0
        %1697 = vmatpush2.xpose.msra.mxu0 0.0
        %1698 = vmatprep.subr.mxu0 0.0
        %1699 = vmatpush2.xpose.msra.mxu0 0.0
        %1700 = vmatprep.mubr.f32.mxu0 %v1626
        %1701 = vmatmul.mubr.f32.gmra.mxu0 %v1625
        %v1702 = vpop.f32.mrf.mxu0
        %v1703 = vadd.f32 0.0, %v1702
        %v1704 = vpop.f32.mrf.mxu0
        %1705 = vmatprep.mubr.f32.mxu0 %v1629
        %1706 = vmatmul.mubr.f32.gmra.mxu0 %v1628
        %v1707 = vpop.f32.mrf.mxu0
        %v1708 = vadd.f32 0.0, %v1707
        %v1709 = vpop.f32.mrf.mxu0
        %1710 = vmatprep.mubr.f32.mxu0 %v1632
        %1711 = vmatmul.mubr.f32.gmra.mxu0 %v1631
        %v1712 = vpop.f32.mrf.mxu0
        %v1713 = vadd.f32 0.0, %v1712
        %v1714 = vpop.f32.mrf.mxu0
        %1715 = vmatprep.mubr.f32.mxu0 %v1635
        %1716 = vmatmul.mubr.f32.gmra.mxu0 %v1634
        %v1717 = vpop.f32.mrf.mxu0
        %v1718 = vadd.f32 0.0, %v1717
        %v1719 = vpop.f32.mrf.mxu0
        %1720 = vdwg.mxu0
        %1721 = vxpose.xlu0.b32.start [1/16] %v1703, 128
        %1722 = vxpose.xlu0.b32.cont [2/16] %v1708, 128
        %1723 = vxpose.xlu0.b32.cont [3/16] %v1713, 128
        %1724 = vxpose.xlu0.b32.cont [4/16] %v1718, 128
        %1725 = vxpose.xlu0.b32.cont [5/16] 0.0, 128
        %1726 = vxpose.xlu0.b32.cont [6/16] 0.0, 128
        %1727 = vxpose.xlu0.b32.cont [7/16] 0.0, 128
        %1728 = vxpose.xlu0.b32.cont [8/16] 0.0, 128
        %1729 = vxpose.xlu0.b32.cont [9/16] 0.0, 128
        %1730 = vxpose.xlu0.b32.cont [10/16] 0.0, 128
        %1731 = vxpose.xlu0.b32.cont [11/16] 0.0, 128
        %1732 = vxpose.xlu0.b32.cont [12/16] 0.0, 128
        %1733 = vxpose.xlu0.b32.cont [13/16] 0.0, 128
        %1734 = vxpose.xlu0.b32.cont [14/16] 0.0, 128
        %1735 = vxpose.xlu0.b32.cont [15/16] 0.0, 128
        %1736 = vxpose.xlu0.b32.end [16/16] 0.0, 128
        %v1737 = vpop.trf.xlu0
        %v1738 = vpop.trf.xlu0
        %v1739 = vpop.trf.xlu0
        %v1740 = vpop.trf.xlu0
        %v1741 = vpop.trf.xlu0
        %v1742 = vpop.trf.xlu0
        %v1743 = vpop.trf.xlu0
        %v1744 = vpop.trf.xlu0
        %v1745 = vpop.trf.xlu0
        %v1746 = vpop.trf.xlu0
        %v1747 = vpop.trf.xlu0
        %v1748 = vpop.trf.xlu0
        %v1749 = vpop.trf.xlu0
        %v1750 = vpop.trf.xlu0
        %v1751 = vpop.trf.xlu0
        %v1752 = vpop.trf.xlu0
        %v1754 = vsel %vm1040, %v1737, 0
        %v1757 = vsel %vm1040, %v1738, 0
        %v1760 = vsel %vm1040, %v1739, 0
        %v1763 = vsel %vm1040, %v1740, 0
        %1765 = vmatprep.subr.mxu0 0.0
        %1766 = vmatpush1.msra.mxu0 0.0
        %1767 = vmatprep.subr.mxu0 0.0
        %1768 = vmatpush1.msra.mxu0 0.0
        %1769 = vmatprep.subr.mxu0 0.0
        %1770 = vmatpush1.msra.mxu0 0.0
        %1771 = vmatprep.subr.mxu0 0.0
        %1772 = vmatpush1.msra.mxu0 0.0
        %1773 = vmatprep.subr.mxu0 0.0
        %1774 = vmatpush1.msra.mxu0 0.0
        %1775 = vmatprep.subr.mxu0 0.0
        %1776 = vmatpush1.msra.mxu0 0.0
        %1777 = vmatprep.subr.mxu0 0.0
        %1778 = vmatpush1.msra.mxu0 0.0
        %1779 = vmatprep.subr.mxu0 0.0
        %1780 = vmatpush1.msra.mxu0 0.0
        %1781 = vmatprep.subr.mxu0 0.0
        %1782 = vmatpush1.msra.mxu0 0.0
        %1783 = vmatprep.subr.mxu0 0.0
        %1784 = vmatpush1.msra.mxu0 0.0
        %1785 = vmatprep.subr.mxu0 0.0
        %1786 = vmatpush1.msra.mxu0 0.0
        %1787 = vmatprep.subr.mxu0 0.0
        %1788 = vmatpush1.msra.mxu0 0.0
        %1789 = vmatprep.subr.mxu0 %v1575
        %1790 = vmatpush1.msra.mxu0 %v1574
        %1791 = vmatprep.subr.mxu0 %v1573
        %1792 = vmatpush1.msra.mxu0 %v1572
        %1793 = vmatprep.subr.mxu0 %v1571
        %1794 = vmatpush1.msra.mxu0 %v1570
        %1795 = vmatprep.subr.mxu0 %v1569
        %1796 = vmatpush1.msra.mxu0 %v1568
        %1797 = vmatprep.subr.mxu0 0.0
        %1798 = vmatpush2.msra.mxu0 0.0
        %1799 = vmatprep.subr.mxu0 0.0
        %1800 = vmatpush2.msra.mxu0 0.0
        %1801 = vmatprep.subr.mxu0 0.0
        %1802 = vmatpush2.msra.mxu0 0.0
        %1803 = vmatprep.subr.mxu0 0.0
        %1804 = vmatpush2.msra.mxu0 0.0
        %1805 = vmatprep.subr.mxu0 0.0
        %1806 = vmatpush2.msra.mxu0 0.0
        %1807 = vmatprep.subr.mxu0 0.0
        %1808 = vmatpush2.msra.mxu0 0.0
        %1809 = vmatprep.subr.mxu0 0.0
        %1810 = vmatpush2.msra.mxu0 0.0
        %1811 = vmatprep.subr.mxu0 0.0
        %1812 = vmatpush2.msra.mxu0 0.0
        %1813 = vmatprep.subr.mxu0 0.0
        %1814 = vmatpush2.msra.mxu0 0.0
        %1815 = vmatprep.subr.mxu0 0.0
        %1816 = vmatpush2.msra.mxu0 0.0
        %1817 = vmatprep.subr.mxu0 0.0
        %1818 = vmatpush2.msra.mxu0 0.0
        %1819 = vmatprep.subr.mxu0 0.0
        %1820 = vmatpush2.msra.mxu0 0.0
        %1821 = vmatprep.subr.mxu0 0.0
        %1822 = vmatpush2.msra.mxu0 0.0
        %1823 = vmatprep.subr.mxu0 0.0
        %1824 = vmatpush2.msra.mxu0 0.0
        %1825 = vmatprep.subr.mxu0 0.0
        %1826 = vmatpush2.msra.mxu0 0.0
        %1827 = vmatprep.subr.mxu0 0.0
        %1828 = vmatpush2.msra.mxu0 0.0
        %1829 = vmatprep.mubr.f32.mxu0 0.0
        %1830 = vmatmul.mubr.f32.gmra.mxu0 %v1754
        %v1831 = vpop.f32.mrf.mxu0
        %v1832 = vadd.f32 0.0, %v1831
        %v1833 = vpop.f32.mrf.mxu0
        %v1834 = vadd.f32 0.0, %v1833
        %1835 = vmatprep.mubr.f32.mxu0 0.0
        %1836 = vmatmul.mubr.f32.gmra.mxu0 %v1757
        %v1837 = vpop.f32.mrf.mxu0
        %v1838 = vadd.f32 0.0, %v1837
        %v1839 = vpop.f32.mrf.mxu0
        %v1840 = vadd.f32 0.0, %v1839
        %1841 = vmatprep.mubr.f32.mxu0 0.0
        %1842 = vmatmul.mubr.f32.gmra.mxu0 %v1760
        %v1843 = vpop.f32.mrf.mxu0
        %v1844 = vadd.f32 0.0, %v1843
        %v1845 = vpop.f32.mrf.mxu0
        %v1846 = vadd.f32 0.0, %v1845
        %1847 = vmatprep.mubr.f32.mxu0 0.0
        %1848 = vmatmul.mubr.f32.gmra.mxu0 %v1763
        %v1849 = vpop.f32.mrf.mxu0
        %v1850 = vadd.f32 0.0, %v1849
        %v1851 = vpop.f32.mrf.mxu0
        %v1852 = vadd.f32 0.0, %v1851
        %1853 = vdwg.mxu0
        %v1854 = vmax.f32 %v571, %v583
        %v1855 = vmax.f32 %v577, %v589
        %v1856 = vmax.f32 %v1854, %v1855
        %v1857 = vrot.slane %v1856, 4
        %v1858 = vmax.f32 %v1856, %v1857
        %v1859 = vrot.slane %v1858, 2
        %v1860 = vmax.f32 %v1858, %v1859
        %v1861 = vrot.slane %v1860, 1
        %v1862 = vmax.f32 %v1860, %v1861
        %v1863 = vmax.f32 %v573, %v585
        %v1864 = vmax.f32 %v579, %v591
        %v1865 = vmax.f32 %v1863, %v1864
        %v1866 = vrot.slane %v1865, 4
        %v1867 = vmax.f32 %v1865, %v1866
        %v1868 = vrot.slane %v1867, 2
        %v1869 = vmax.f32 %v1867, %v1868
        %v1870 = vrot.slane %v1869, 1
        %v1871 = vmax.f32 %v1869, %v1870
        %v1872 = vsub.f32 %v571, %v1862
        %v1873 = vsub.f32 %v573, %v1871
        %v1874 = vsub.f32 %v577, %v1862
        %v1875 = vsub.f32 %v579, %v1871
        %v1876 = vsub.f32 %v583, %v1862
        %v1877 = vsub.f32 %v585, %v1871
        %v1878 = vsub.f32 %v589, %v1862
        %v1879 = vsub.f32 %v591, %v1871
        %v1880 = vmul.f32 %v1872, 1.442695
        %v1881 = vpow.pop %v1880
        %v1882 = vmul.f32 %v1873, 1.442695
        %v1883 = vpow.pop %v1882
        %v1884 = vmul.f32 %v1874, 1.442695
        %v1885 = vpow.pop %v1884
        %v1886 = vmul.f32 %v1875, 1.442695
        %v1887 = vpow.pop %v1886
        %v1888 = vmul.f32 %v1876, 1.442695
        %v1889 = vpow.pop %v1888
        %v1890 = vmul.f32 %v1877, 1.442695
        %v1891 = vpow.pop %v1890
        %v1892 = vmul.f32 %v1878, 1.442695
        %v1893 = vpow.pop %v1892
        %v1894 = vmul.f32 %v1879, 1.442695
        %v1895 = vpow.pop %v1894
        %v1896 = vadd.f32 %v1881, %v1885
        %v1897 = vadd.f32 %v1896, %v1889
        %v1898 = vadd.f32 %v1897, %v1893
        %v1899 = vrot.slane %v1898, 4
        %v1900 = vadd.f32 %v1898, %v1899
        %v1901 = vrot.slane %v1900, 2
        %v1902 = vadd.f32 %v1900, %v1901
        %v1903 = vrot.slane %v1902, 1
        %v1904 = vadd.f32 %v1902, %v1903
        %v1905 = vadd.f32 %v1883, %v1887
        %v1906 = vadd.f32 %v1905, %v1891
        %v1907 = vadd.f32 %v1906, %v1895
        %v1908 = vrot.slane %v1907, 4
        %v1909 = vadd.f32 %v1907, %v1908
        %v1910 = vrot.slane %v1909, 2
        %v1911 = vadd.f32 %v1909, %v1910
        %v1912 = vrot.slane %v1911, 1
        %v1913 = vadd.f32 %v1911, %v1912
        %v1914 = vrcp.pop %v1904
        %v1915 = vmul.f32 %v1881, %v1914
        %v1916 = vrcp.pop %v1913
        %v1917 = vmul.f32 %v1883, %v1916
        %v1918 = vmul.f32 %v1885, %v1914
        %v1919 = vmul.f32 %v1887, %v1916
        %v1920 = vmul.f32 %v1889, %v1914
        %v1921 = vmul.f32 %v1891, %v1916
        %v1922 = vmul.f32 %v1893, %v1914
        %v1923 = vmul.f32 %v1895, %v1916
        %v1924 = vmul.f32 %v1915, 0.17677669
        %v1925 = vmul.f32 %v1917, 0.17677669
        %v1926 = vmul.f32 %v1918, 0.17677669
        %v1927 = vmul.f32 %v1919, 0.17677669
        %v1928 = vmul.f32 %v1920, 0.17677669
        %v1929 = vmul.f32 %v1921, 0.17677669
        %v1930 = vmul.f32 %v1922, 0.17677669
        %v1931 = vmul.f32 %v1923, 0.17677669
        %v1932 = vmax.f32 %v667, %v669
        %1933 = vmax.xlane.f32.xlu0 %v1932
        %v1934 = vpop.xlane.xlu0 %1933
        %v1935 = vmax.f32 %v673, %v675
        %1936 = vmax.xlane.f32.xlu0 %v1935
        %v1937 = vpop.xlane.xlu0 %1936
        %v1938 = vmax.f32 %v679, %v681
        %1939 = vmax.xlane.f32.xlu0 %v1938
        %v1940 = vpop.xlane.xlu0 %1939
        %v1941 = vmax.f32 %v685, %v687
        %1942 = vmax.xlane.f32.xlu0 %v1941
        %v1943 = vpop.xlane.xlu0 %1942
        %v1944 = vsub.f32 %v667, %v1934
        %v1945 = vsub.f32 %v669, %v1934
        %v1946 = vsub.f32 %v673, %v1937
        %v1947 = vsub.f32 %v675, %v1937
        %v1948 = vsub.f32 %v679, %v1940
        %v1949 = vsub.f32 %v681, %v1940
        %v1950 = vsub.f32 %v685, %v1943
        %v1951 = vsub.f32 %v687, %v1943
        %v1952 = vmul.f32 %v1944, 1.442695
        %v1953 = vpow.pop %v1952
        %v1954 = vmul.f32 %v1945, 1.442695
        %v1955 = vpow.pop %v1954
        %v1956 = vmul.f32 %v1946, 1.442695
        %v1957 = vpow.pop %v1956
        %v1958 = vmul.f32 %v1947, 1.442695
        %v1959 = vpow.pop %v1958
        %v1960 = vmul.f32 %v1948, 1.442695
        %v1961 = vpow.pop %v1960
        %v1962 = vmul.f32 %v1949, 1.442695
        %v1963 = vpow.pop %v1962
        %v1964 = vmul.f32 %v1950, 1.442695
        %v1965 = vpow.pop %v1964
        %v1966 = vmul.f32 %v1951, 1.442695
        %v1967 = vpow.pop %v1966
        %v1968 = vadd.f32 %v1953, %v1955
        %1969 = vadd.xlane.f32.xlu0 %v1968
        %v1970 = vpop.xlane.xlu0 %1969
        %v1971 = vadd.f32 %v1957, %v1959
        %1972 = vadd.xlane.f32.xlu0 %v1971
        %v1973 = vpop.xlane.xlu0 %1972
        %v1974 = vadd.f32 %v1961, %v1963
        %1975 = vadd.xlane.f32.xlu0 %v1974
        %v1976 = vpop.xlane.xlu0 %1975
        %v1977 = vadd.f32 %v1965, %v1967
        %1978 = vadd.xlane.f32.xlu0 %v1977
        %v1979 = vpop.xlane.xlu0 %1978
        %v1980 = vrcp.pop %v1970
        %v1981 = vmul.f32 %v1953, %v1980
        %v1982 = vmul.f32 %v1955, %v1980
        %v1983 = vrcp.pop %v1973
        %v1984 = vmul.f32 %v1957, %v1983
        %v1985 = vmul.f32 %v1959, %v1983
        %v1986 = vrcp.pop %v1976
        %v1987 = vmul.f32 %v1961, %v1986
        %v1988 = vmul.f32 %v1963, %v1986
        %v1989 = vrcp.pop %v1979
        %v1990 = vmul.f32 %v1965, %v1989
        %v1991 = vmul.f32 %v1967, %v1989
        %1992 = vmatprep.subr.mxu0 0.0
        %1993 = vmatpush1.xpose.msra.mxu0 0.0
        %1994 = vmatprep.subr.mxu0 0.0
        %1995 = vmatpush1.xpose.msra.mxu0 0.0
        %1996 = vmatprep.subr.mxu0 0.0
        %1997 = vmatpush1.xpose.msra.mxu0 0.0
        %1998 = vmatprep.subr.mxu0 0.0
        %1999 = vmatpush1.xpose.msra.mxu0 0.0
        %2000 = vmatprep.subr.mxu0 0.0
        %2001 = vmatpush1.xpose.msra.mxu0 0.0
        %2002 = vmatprep.subr.mxu0 0.0
        %2003 = vmatpush1.xpose.msra.mxu0 0.0
        %2004 = vmatprep.subr.mxu0 0.0
        %2005 = vmatpush1.xpose.msra.mxu0 0.0
        %2006 = vmatprep.subr.mxu0 0.0
        %2007 = vmatpush1.xpose.msra.mxu0 0.0
        %2008 = vmatprep.subr.mxu0 0.0
        %2009 = vmatpush1.xpose.msra.mxu0 0.0
        %2010 = vmatprep.subr.mxu0 0.0
        %2011 = vmatpush1.xpose.msra.mxu0 0.0
        %2012 = vmatprep.subr.mxu0 0.0
        %2013 = vmatpush1.xpose.msra.mxu0 0.0
        %2014 = vmatprep.subr.mxu0 0.0
        %2015 = vmatpush1.xpose.msra.mxu0 0.0
        %2016 = vmatprep.subr.mxu0 %v783
        %2017 = vmatpush1.xpose.msra.mxu0 %v781
        %2018 = vmatprep.subr.mxu0 %v777
        %2019 = vmatpush1.xpose.msra.mxu0 %v775
        %2020 = vmatprep.subr.mxu0 %v771
        %2021 = vmatpush1.xpose.msra.mxu0 %v769
        %2022 = vmatprep.subr.mxu0 %v765
        %2023 = vmatpush1.xpose.msra.mxu0 %v763
        %2024 = vmatprep.subr.mxu0 0.0
        %2025 = vmatpush2.xpose.msra.mxu0 0.0
        %2026 = vmatprep.subr.mxu0 0.0
        %2027 = vmatpush2.xpose.msra.mxu0 0.0
        %2028 = vmatprep.subr.mxu0 0.0
        %2029 = vmatpush2.xpose.msra.mxu0 0.0
        %2030 = vmatprep.subr.mxu0 0.0
        %2031 = vmatpush2.xpose.msra.mxu0 0.0
        %2032 = vmatprep.subr.mxu0 0.0
        %2033 = vmatpush2.xpose.msra.mxu0 0.0
        %2034 = vmatprep.subr.mxu0 0.0
        %2035 = vmatpush2.xpose.msra.mxu0 0.0
        %2036 = vmatprep.subr.mxu0 0.0
        %2037 = vmatpush2.xpose.msra.mxu0 0.0
        %2038 = vmatprep.subr.mxu0 0.0
        %2039 = vmatpush2.xpose.msra.mxu0 0.0
        %2040 = vmatprep.subr.mxu0 0.0
        %2041 = vmatpush2.xpose.msra.mxu0 0.0
        %2042 = vmatprep.subr.mxu0 0.0
        %2043 = vmatpush2.xpose.msra.mxu0 0.0
        %2044 = vmatprep.subr.mxu0 0.0
        %2045 = vmatpush2.xpose.msra.mxu0 0.0
        %2046 = vmatprep.subr.mxu0 0.0
        %2047 = vmatpush2.xpose.msra.mxu0 0.0
        %2048 = vmatprep.subr.mxu0 0.0
        %2049 = vmatpush2.xpose.msra.mxu0 0.0
        %2050 = vmatprep.subr.mxu0 0.0
        %2051 = vmatpush2.xpose.msra.mxu0 0.0
        %2052 = vmatprep.subr.mxu0 0.0
        %2053 = vmatpush2.xpose.msra.mxu0 0.0
        %2054 = vmatprep.subr.mxu0 0.0
        %2055 = vmatpush2.xpose.msra.mxu0 0.0
        %2056 = vmatprep.mubr.f32.mxu0 %v1982
        %2057 = vmatmul.mubr.f32.gmra.mxu0 %v1981
        %v2058 = vpop.f32.mrf.mxu0
        %v2059 = vadd.f32 0.0, %v2058
        %v2060 = vpop.f32.mrf.mxu0
        %2061 = vmatprep.mubr.f32.mxu0 %v1985
        %2062 = vmatmul.mubr.f32.gmra.mxu0 %v1984
        %v2063 = vpop.f32.mrf.mxu0
        %v2064 = vadd.f32 0.0, %v2063
        %v2065 = vpop.f32.mrf.mxu0
        %2066 = vmatprep.mubr.f32.mxu0 %v1988
        %2067 = vmatmul.mubr.f32.gmra.mxu0 %v1987
        %v2068 = vpop.f32.mrf.mxu0
        %v2069 = vadd.f32 0.0, %v2068
        %v2070 = vpop.f32.mrf.mxu0
        %2071 = vmatprep.mubr.f32.mxu0 %v1991
        %2072 = vmatmul.mubr.f32.gmra.mxu0 %v1990
        %v2073 = vpop.f32.mrf.mxu0
        %v2074 = vadd.f32 0.0, %v2073
        %v2075 = vpop.f32.mrf.mxu0
        %2076 = vdwg.mxu0
        %2077 = vxpose.xlu0.b32.start [1/16] %v2059, 128
        %2078 = vxpose.xlu0.b32.cont [2/16] %v2064, 128
        %2079 = vxpose.xlu0.b32.cont [3/16] %v2069, 128
        %2080 = vxpose.xlu0.b32.cont [4/16] %v2074, 128
        %2081 = vxpose.xlu0.b32.cont [5/16] 0.0, 128
        %2082 = vxpose.xlu0.b32.cont [6/16] 0.0, 128
        %2083 = vxpose.xlu0.b32.cont [7/16] 0.0, 128
        %2084 = vxpose.xlu0.b32.cont [8/16] 0.0, 128
        %2085 = vxpose.xlu0.b32.cont [9/16] 0.0, 128
        %2086 = vxpose.xlu0.b32.cont [10/16] 0.0, 128
        %2087 = vxpose.xlu0.b32.cont [11/16] 0.0, 128
        %2088 = vxpose.xlu0.b32.cont [12/16] 0.0, 128
        %2089 = vxpose.xlu0.b32.cont [13/16] 0.0, 128
        %2090 = vxpose.xlu0.b32.cont [14/16] 0.0, 128
        %2091 = vxpose.xlu0.b32.cont [15/16] 0.0, 128
        %2092 = vxpose.xlu0.b32.end [16/16] 0.0, 128
        %v2093 = vpop.trf.xlu0
        %v2094 = vpop.trf.xlu0
        %v2095 = vpop.trf.xlu0
        %v2096 = vpop.trf.xlu0
        %v2097 = vpop.trf.xlu0
        %v2098 = vpop.trf.xlu0
        %v2099 = vpop.trf.xlu0
        %v2100 = vpop.trf.xlu0
        %v2101 = vpop.trf.xlu0
        %v2102 = vpop.trf.xlu0
        %v2103 = vpop.trf.xlu0
        %v2104 = vpop.trf.xlu0
        %v2105 = vpop.trf.xlu0
        %v2106 = vpop.trf.xlu0
        %v2107 = vpop.trf.xlu0
        %v2108 = vpop.trf.xlu0
        %v2110 = vsel %vm1040, %v2093, 0
        %v2113 = vsel %vm1040, %v2094, 0
        %v2116 = vsel %vm1040, %v2095, 0
        %v2119 = vsel %vm1040, %v2096, 0
        %2121 = vmatprep.subr.mxu0 0.0
        %2122 = vmatpush1.msra.mxu0 0.0
        %2123 = vmatprep.subr.mxu0 0.0
        %2124 = vmatpush1.msra.mxu0 0.0
        %2125 = vmatprep.subr.mxu0 0.0
        %2126 = vmatpush1.msra.mxu0 0.0
        %2127 = vmatprep.subr.mxu0 0.0
        %2128 = vmatpush1.msra.mxu0 0.0
        %2129 = vmatprep.subr.mxu0 0.0
        %2130 = vmatpush1.msra.mxu0 0.0
        %2131 = vmatprep.subr.mxu0 0.0
        %2132 = vmatpush1.msra.mxu0 0.0
        %2133 = vmatprep.subr.mxu0 0.0
        %2134 = vmatpush1.msra.mxu0 0.0
        %2135 = vmatprep.subr.mxu0 0.0
        %2136 = vmatpush1.msra.mxu0 0.0
        %2137 = vmatprep.subr.mxu0 0.0
        %2138 = vmatpush1.msra.mxu0 0.0
        %2139 = vmatprep.subr.mxu0 0.0
        %2140 = vmatpush1.msra.mxu0 0.0
        %2141 = vmatprep.subr.mxu0 0.0
        %2142 = vmatpush1.msra.mxu0 0.0
        %2143 = vmatprep.subr.mxu0 0.0
        %2144 = vmatpush1.msra.mxu0 0.0
        %2145 = vmatprep.subr.mxu0 %v1931
        %2146 = vmatpush1.msra.mxu0 %v1930
        %2147 = vmatprep.subr.mxu0 %v1929
        %2148 = vmatpush1.msra.mxu0 %v1928
        %2149 = vmatprep.subr.mxu0 %v1927
        %2150 = vmatpush1.msra.mxu0 %v1926
        %2151 = vmatprep.subr.mxu0 %v1925
        %2152 = vmatpush1.msra.mxu0 %v1924
        %2153 = vmatprep.subr.mxu0 0.0
        %2154 = vmatpush2.msra.mxu0 0.0
        %2155 = vmatprep.subr.mxu0 0.0
        %2156 = vmatpush2.msra.mxu0 0.0
        %2157 = vmatprep.subr.mxu0 0.0
        %2158 = vmatpush2.msra.mxu0 0.0
        %2159 = vmatprep.subr.mxu0 0.0
        %2160 = vmatpush2.msra.mxu0 0.0
        %2161 = vmatprep.subr.mxu0 0.0
        %2162 = vmatpush2.msra.mxu0 0.0
        %2163 = vmatprep.subr.mxu0 0.0
        %2164 = vmatpush2.msra.mxu0 0.0
        %2165 = vmatprep.subr.mxu0 0.0
        %2166 = vmatpush2.msra.mxu0 0.0
        %2167 = vmatprep.subr.mxu0 0.0
        %2168 = vmatpush2.msra.mxu0 0.0
        %2169 = vmatprep.subr.mxu0 0.0
        %2170 = vmatpush2.msra.mxu0 0.0
        %2171 = vmatprep.subr.mxu0 0.0
        %2172 = vmatpush2.msra.mxu0 0.0
        %2173 = vmatprep.subr.mxu0 0.0
        %2174 = vmatpush2.msra.mxu0 0.0
        %2175 = vmatprep.subr.mxu0 0.0
        %2176 = vmatpush2.msra.mxu0 0.0
        %2177 = vmatprep.subr.mxu0 0.0
        %2178 = vmatpush2.msra.mxu0 0.0
        %2179 = vmatprep.subr.mxu0 0.0
        %2180 = vmatpush2.msra.mxu0 0.0
        %2181 = vmatprep.subr.mxu0 0.0
        %2182 = vmatpush2.msra.mxu0 0.0
        %2183 = vmatprep.subr.mxu0 0.0
        %2184 = vmatpush2.msra.mxu0 0.0
        %2185 = vmatprep.mubr.f32.mxu0 0.0
        %2186 = vmatmul.mubr.f32.gmra.mxu0 %v2110
        %v2187 = vpop.f32.mrf.mxu0
        %v2188 = vadd.f32 0.0, %v2187
        %v2189 = vpop.f32.mrf.mxu0
        %v2190 = vadd.f32 0.0, %v2189
        %2191 = vmatprep.mubr.f32.mxu0 0.0
        %2192 = vmatmul.mubr.f32.gmra.mxu0 %v2113
        %v2193 = vpop.f32.mrf.mxu0
        %v2194 = vadd.f32 0.0, %v2193
        %v2195 = vpop.f32.mrf.mxu0
        %v2196 = vadd.f32 0.0, %v2195
        %2197 = vmatprep.mubr.f32.mxu0 0.0
        %2198 = vmatmul.mubr.f32.gmra.mxu0 %v2116
        %v2199 = vpop.f32.mrf.mxu0
        %v2200 = vadd.f32 0.0, %v2199
        %v2201 = vpop.f32.mrf.mxu0
        %v2202 = vadd.f32 0.0, %v2201
        %2203 = vmatprep.mubr.f32.mxu0 0.0
        %2204 = vmatmul.mubr.f32.gmra.mxu0 %v2119
        %v2205 = vpop.f32.mrf.mxu0
        %v2206 = vadd.f32 0.0, %v2205
        %v2207 = vpop.f32.mrf.mxu0
        %v2208 = vadd.f32 0.0, %v2207
        %2209 = vdwg.mxu0
        %v2210 = vld [vmem:[%s2] sm:$0xff]
        %v2211 = vld [vmem:[%s2 + $0x8] sm:$0xff]
        %v2212 = vld [vmem:[%s2 + $0x10] sm:$0xff]
        %v2213 = vld [vmem:[%s2 + $0x18] sm:$0xff]
        %v2214 = vld [vmem:[%s2 + $0x20] sm:$0xff]
        %v2215 = vld [vmem:[%s2 + $0x28] sm:$0xff]
        %v2216 = vld [vmem:[%s2 + $0x30] sm:$0xff]
        %v2217 = vld [vmem:[%s2 + $0x38] sm:$0xff]
        %v2218 = vld [vmem:[%s3] sm:$0xff]
        %v2219 = vld [vmem:[%s3 + $0x8] sm:$0xff]
        %v2220 = vld [vmem:[%s3 + $0x10] sm:$0xff]
        %v2221 = vld [vmem:[%s3 + $0x18] sm:$0xff]
        %v2222 = vld [vmem:[%s3 + $0x20] sm:$0xff]
        %v2223 = vld [vmem:[%s3 + $0x28] sm:$0xff]
        %v2224 = vld [vmem:[%s3 + $0x30] sm:$0xff]
        %v2225 = vld [vmem:[%s3 + $0x38] sm:$0xff]
        %2227 = vset.pattern.permute.xlu0 0
        %2228 = vperm.xlu0 %2227, %v2218
        %v2229 = vpop.permute.xlu0 %2228
        %2232 = vset.pattern.permute.xlu0 0
        %2233 = vperm.xlu0 %2232, %v2219
        %v2234 = vpop.permute.xlu0 %2233
        %2237 = vset.pattern.permute.xlu0 0
        %2238 = vperm.xlu0 %2237, %v2220
        %v2239 = vpop.permute.xlu0 %2238
        %2242 = vset.pattern.permute.xlu0 0
        %2243 = vperm.xlu0 %2242, %v2221
        %v2244 = vpop.permute.xlu0 %2243
        %2247 = vset.pattern.permute.xlu0 0
        %2248 = vperm.xlu0 %2247, %v2222
        %v2249 = vpop.permute.xlu0 %2248
        %2252 = vset.pattern.permute.xlu0 0
        %2253 = vperm.xlu0 %2252, %v2223
        %v2254 = vpop.permute.xlu0 %2253
        %2257 = vset.pattern.permute.xlu0 0
        %2258 = vperm.xlu0 %2257, %v2224
        %v2259 = vpop.permute.xlu0 %2258
        %2262 = vset.pattern.permute.xlu0 0
        %2263 = vperm.xlu0 %2262, %v2225
        %v2264 = vpop.permute.xlu0 %2263
        %2266 = vmatprep.subr.mxu0 %v2208
        %2267 = vmatpush1.msra.mxu0 %v2206
        %2268 = vmatprep.subr.mxu0 %v2202
        %2269 = vmatpush1.msra.mxu0 %v2200
        %2270 = vmatprep.subr.mxu0 %v2196
        %2271 = vmatpush1.msra.mxu0 %v2194
        %2272 = vmatprep.subr.mxu0 %v2190
        %2273 = vmatpush1.msra.mxu0 %v2188
        %2274 = vmatprep.subr.mxu0 %v1852
        %2275 = vmatpush1.msra.mxu0 %v1850
        %2276 = vmatprep.subr.mxu0 %v1846
        %2277 = vmatpush1.msra.mxu0 %v1844
        %2278 = vmatprep.subr.mxu0 %v1840
        %2279 = vmatpush1.msra.mxu0 %v1838
        %2280 = vmatprep.subr.mxu0 %v1834
        %2281 = vmatpush1.msra.mxu0 %v1832
        %2282 = vmatprep.subr.mxu0 %v1496
        %2283 = vmatpush1.msra.mxu0 %v1494
        %2284 = vmatprep.subr.mxu0 %v1490
        %2285 = vmatpush1.msra.mxu0 %v1488
        %2286 = vmatprep.subr.mxu0 %v1484
        %2287 = vmatpush1.msra.mxu0 %v1482
        %2288 = vmatprep.subr.mxu0 %v1478
        %2289 = vmatpush1.msra.mxu0 %v1476
        %2290 = vmatprep.subr.mxu0 %v1140
        %2291 = vmatpush1.msra.mxu0 %v1138
        %2292 = vmatprep.subr.mxu0 %v1134
        %2293 = vmatpush1.msra.mxu0 %v1132
        %2294 = vmatprep.subr.mxu0 %v1128
        %2295 = vmatpush1.msra.mxu0 %v1126
        %2296 = vmatprep.subr.mxu0 %v1122
        %2297 = vmatpush1.msra.mxu0 %v1120
        %2298 = vmatprep.subr.mxu0 0.0
        %2299 = vmatpush2.msra.mxu0 0.0
        %2300 = vmatprep.subr.mxu0 0.0
        %2301 = vmatpush2.msra.mxu0 0.0
        %2302 = vmatprep.subr.mxu0 0.0
        %2303 = vmatpush2.msra.mxu0 0.0
        %2304 = vmatprep.subr.mxu0 0.0
        %2305 = vmatpush2.msra.mxu0 0.0
        %2306 = vmatprep.subr.mxu0 0.0
        %2307 = vmatpush2.msra.mxu0 0.0
        %2308 = vmatprep.subr.mxu0 0.0
        %2309 = vmatpush2.msra.mxu0 0.0
        %2310 = vmatprep.subr.mxu0 0.0
        %2311 = vmatpush2.msra.mxu0 0.0
        %2312 = vmatprep.subr.mxu0 0.0
        %2313 = vmatpush2.msra.mxu0 0.0
        %2314 = vmatprep.subr.mxu0 0.0
        %2315 = vmatpush2.msra.mxu0 0.0
        %2316 = vmatprep.subr.mxu0 0.0
        %2317 = vmatpush2.msra.mxu0 0.0
        %2318 = vmatprep.subr.mxu0 0.0
        %2319 = vmatpush2.msra.mxu0 0.0
        %2320 = vmatprep.subr.mxu0 0.0
        %2321 = vmatpush2.msra.mxu0 0.0
        %2322 = vmatprep.subr.mxu0 0.0
        %2323 = vmatpush2.msra.mxu0 0.0
        %2324 = vmatprep.subr.mxu0 0.0
        %2325 = vmatpush2.msra.mxu0 0.0
        %2326 = vmatprep.subr.mxu0 0.0
        %2327 = vmatpush2.msra.mxu0 0.0
        %2328 = vmatprep.subr.mxu0 0.0
        %2329 = vmatpush2.msra.mxu0 0.0
        %2330 = vmatprep.mubr.f32.mxu0 0.0
        %2331 = vmatmul.mubr.f32.gmra.mxu0 %v2210
        %v2332 = vpop.f32.mrf.mxu0
        %v2333 = vadd.f32 %v2229, %v2332
        %v2334 = vpop.f32.mrf.mxu0
        %v2335 = vadd.f32 %v2229, %v2334
        %2336 = vmatprep.mubr.f32.mxu0 0.0
        %2337 = vmatmul.mubr.f32.gmra.mxu0 %v2211
        %v2338 = vpop.f32.mrf.mxu0
        %v2339 = vadd.f32 %v2234, %v2338
        %v2340 = vpop.f32.mrf.mxu0
        %v2341 = vadd.f32 %v2234, %v2340
        %2342 = vmatprep.mubr.f32.mxu0 0.0
        %2343 = vmatmul.mubr.f32.gmra.mxu0 %v2212
        %v2344 = vpop.f32.mrf.mxu0
        %v2345 = vadd.f32 %v2239, %v2344
        %v2346 = vpop.f32.mrf.mxu0
        %v2347 = vadd.f32 %v2239, %v2346
        %2348 = vmatprep.mubr.f32.mxu0 0.0
        %2349 = vmatmul.mubr.f32.gmra.mxu0 %v2213
        %v2350 = vpop.f32.mrf.mxu0
        %v2351 = vadd.f32 %v2244, %v2350
        %v2352 = vpop.f32.mrf.mxu0
        %v2353 = vadd.f32 %v2244, %v2352
        %2354 = vmatprep.mubr.f32.mxu0 0.0
        %2355 = vmatmul.mubr.f32.gmra.mxu0 %v2214
        %v2356 = vpop.f32.mrf.mxu0
        %v2357 = vadd.f32 %v2249, %v2356
        %v2358 = vpop.f32.mrf.mxu0
        %v2359 = vadd.f32 %v2249, %v2358
        %2360 = vmatprep.mubr.f32.mxu0 0.0
        %2361 = vmatmul.mubr.f32.gmra.mxu0 %v2215
        %v2362 = vpop.f32.mrf.mxu0
        %v2363 = vadd.f32 %v2254, %v2362
        %v2364 = vpop.f32.mrf.mxu0
        %v2365 = vadd.f32 %v2254, %v2364
        %2366 = vmatprep.mubr.f32.mxu0 0.0
        %2367 = vmatmul.mubr.f32.gmra.mxu0 %v2216
        %v2368 = vpop.f32.mrf.mxu0
        %v2369 = vadd.f32 %v2259, %v2368
        %v2370 = vpop.f32.mrf.mxu0
        %v2371 = vadd.f32 %v2259, %v2370
        %2372 = vmatprep.mubr.f32.mxu0 0.0
        %2373 = vmatmul.mubr.f32.gmra.mxu0 %v2217
        %v2374 = vpop.f32.mrf.mxu0
        %v2375 = vadd.f32 %v2264, %v2374
        %v2376 = vpop.f32.mrf.mxu0
        %v2377 = vadd.f32 %v2264, %v2376
        %2378 = vdwg.mxu0
        %v2379 = vmul.f32 %v2333, %v2333
        %v2380 = vmul.f32 %v2335, %v2335
        %v2381 = vmul.f32 %v2339, %v2339
        %v2382 = vmul.f32 %v2341, %v2341
        %v2383 = vmul.f32 %v2345, %v2345
        %v2384 = vmul.f32 %v2347, %v2347
        %v2385 = vmul.f32 %v2351, %v2351
        %v2386 = vmul.f32 %v2353, %v2353
        %v2387 = vmul.f32 %v2357, %v2357
        %v2388 = vmul.f32 %v2359, %v2359
        %v2389 = vmul.f32 %v2363, %v2363
        %v2390 = vmul.f32 %v2365, %v2365
        %v2391 = vmul.f32 %v2369, %v2369
        %v2392 = vmul.f32 %v2371, %v2371
        %v2393 = vmul.f32 %v2375, %v2375
        %v2394 = vmul.f32 %v2377, %v2377
        %v2395 = vadd.f32 %v2379, %v2381
        %v2396 = vadd.f32 %v2395, %v2383
        %v2397 = vadd.f32 %v2396, %v2385
        %v2398 = vadd.f32 %v2397, %v2387
        %v2399 = vadd.f32 %v2398, %v2389
        %v2400 = vadd.f32 %v2399, %v2391
        %v2401 = vadd.f32 %v2400, %v2393
        %v2402 = vrot.slane %v2401, 4
        %v2403 = vadd.f32 %v2401, %v2402
        %v2404 = vrot.slane %v2403, 2
        %v2405 = vadd.f32 %v2403, %v2404
        %v2406 = vrot.slane %v2405, 1
        %v2407 = vadd.f32 %v2405, %v2406
        %v2408 = vadd.f32 %v2380, %v2382
        %v2409 = vadd.f32 %v2408, %v2384
        %v2410 = vadd.f32 %v2409, %v2386
        %v2411 = vadd.f32 %v2410, %v2388
        %v2412 = vadd.f32 %v2411, %v2390
        %v2413 = vadd.f32 %v2412, %v2392
        %v2414 = vadd.f32 %v2413, %v2394
        %v2415 = vrot.slane %v2414, 4
        %v2416 = vadd.f32 %v2414, %v2415
        %v2417 = vrot.slane %v2416, 2
        %v2418 = vadd.f32 %v2416, %v2417
        %v2419 = vrot.slane %v2418, 1
        %v2420 = vadd.f32 %v2418, %v2419
        %v2421 = vrsqrt.pop %v2407
        %v2422 = vmul.f32 %v2407, %v2421
        %vm2423 = vcmp.eq.f32.partialorder %v2407, inf
        %v2424 = vsel %vm2423, %v2407, %v2422
        %vm2425 = vcmp.eq.f32.partialorder %v2407, 0.0
        %v2426 = vand.u32 %v2407, 2147483648
        %v2427 = vsel %vm2425, %v2426, %v2424
        %v2428 = vrsqrt.pop %v2420
        %v2429 = vmul.f32 %v2420, %v2428
        %vm2430 = vcmp.eq.f32.partialorder %v2420, inf
        %v2431 = vsel %vm2430, %v2420, %v2429
        %vm2432 = vcmp.eq.f32.partialorder %v2420, 0.0
        %v2433 = vand.u32 %v2420, 2147483648
        %v2434 = vsel %vm2432, %v2433, %v2431
        %v2435 = vmax.f32 %v2427, 1e-12
        %v2436 = vmax.f32 %v2434, 1e-12
        %v2437 = vrcp.pop %v2435
        %v2438 = vmul.f32 %v2333, %v2437
        %v2439 = vrcp.pop %v2436
        %v2440 = vmul.f32 %v2335, %v2439
        %v2441 = vmul.f32 %v2339, %v2437
        %v2442 = vmul.f32 %v2341, %v2439
        %v2443 = vmul.f32 %v2345, %v2437
        %v2444 = vmul.f32 %v2347, %v2439
        %v2445 = vmul.f32 %v2351, %v2437
        %v2446 = vmul.f32 %v2353, %v2439
        %v2447 = vmul.f32 %v2357, %v2437
        %v2448 = vmul.f32 %v2359, %v2439
        %v2449 = vmul.f32 %v2363, %v2437
        %v2450 = vmul.f32 %v2365, %v2439
        %v2451 = vmul.f32 %v2369, %v2437
        %v2452 = vmul.f32 %v2371, %v2439
        %v2453 = vmul.f32 %v2375, %v2437
        %v2454 = vmul.f32 %v2377, %v2439
        %v2455 = vld [vmem:[%s4] sm:$0xff]
        %v2456 = vld [vmem:[%s4 + $0x8] sm:$0xff]
        %v2457 = vld [vmem:[%s4 + $0x10] sm:$0xff]
        %v2458 = vld [vmem:[%s4 + $0x18] sm:$0xff]
        %v2459 = vld [vmem:[%s4 + $0x20] sm:$0xff]
        %v2460 = vld [vmem:[%s4 + $0x28] sm:$0xff]
        %v2461 = vld [vmem:[%s4 + $0x30] sm:$0xff]
        %v2462 = vld [vmem:[%s4 + $0x38] sm:$0xff]
        %2464 = vset.pattern.permute.xlu0 0
        %2465 = vperm.xlu0 %2464, %v2455
        %v2466 = vpop.permute.xlu0 %2465
        %2469 = vset.pattern.permute.xlu0 0
        %2470 = vperm.xlu0 %2469, %v2456
        %v2471 = vpop.permute.xlu0 %2470
        %2474 = vset.pattern.permute.xlu0 0
        %2475 = vperm.xlu0 %2474, %v2457
        %v2476 = vpop.permute.xlu0 %2475
        %2479 = vset.pattern.permute.xlu0 0
        %2480 = vperm.xlu0 %2479, %v2458
        %v2481 = vpop.permute.xlu0 %2480
        %2484 = vset.pattern.permute.xlu0 0
        %2485 = vperm.xlu0 %2484, %v2459
        %v2486 = vpop.permute.xlu0 %2485
        %2489 = vset.pattern.permute.xlu0 0
        %2490 = vperm.xlu0 %2489, %v2460
        %v2491 = vpop.permute.xlu0 %2490
        %2494 = vset.pattern.permute.xlu0 0
        %2495 = vperm.xlu0 %2494, %v2461
        %v2496 = vpop.permute.xlu0 %2495
        %2499 = vset.pattern.permute.xlu0 0
        %2500 = vperm.xlu0 %2499, %v2462
        %v2501 = vpop.permute.xlu0 %2500
        %v2503 = vmul.f32 %v2438, %v2466
        %v2504 = vmul.f32 %v2440, %v2466
        %v2505 = vmul.f32 %v2441, %v2471
        %v2506 = vmul.f32 %v2442, %v2471
        %v2507 = vmul.f32 %v2443, %v2476
        %v2508 = vmul.f32 %v2444, %v2476
        %v2509 = vmul.f32 %v2445, %v2481
        %v2510 = vmul.f32 %v2446, %v2481
        %v2511 = vmul.f32 %v2447, %v2486
        %v2512 = vmul.f32 %v2448, %v2486
        %v2513 = vmul.f32 %v2449, %v2491
        %v2514 = vmul.f32 %v2450, %v2491
        %v2515 = vmul.f32 %v2451, %v2496
        %v2516 = vmul.f32 %v2452, %v2496
        %v2517 = vmul.f32 %v2453, %v2501
        %v2518 = vmul.f32 %v2454, %v2501
        %v2519 = vmul.f32 %v2503, 8.0
        %v2520 = vmul.f32 %v2504, 8.0
        %v2521 = vmul.f32 %v2505, 8.0
        %v2522 = vmul.f32 %v2506, 8.0
        %v2523 = vmul.f32 %v2507, 8.0
        %v2524 = vmul.f32 %v2508, 8.0
        %v2525 = vmul.f32 %v2509, 8.0
        %v2526 = vmul.f32 %v2510, 8.0
        %v2527 = vmul.f32 %v2511, 8.0
        %v2528 = vmul.f32 %v2512, 8.0
        %v2529 = vmul.f32 %v2513, 8.0
        %v2530 = vmul.f32 %v2514, 8.0
        %v2531 = vmul.f32 %v2515, 8.0
        %v2532 = vmul.f32 %v2516, 8.0
        %v2533 = vmul.f32 %v2517, 8.0
        %v2534 = vmul.f32 %v2518, 8.0
        %2535 = vst [vmem:[%s217] sm:$0xff] %v2519
        %2536 = vst [vmem:[%s217 + $0x8] sm:$0xff] %v2520
        %2537 = vst [vmem:[%s217 + $0x10] sm:$0xff] %v2521
        %2538 = vst [vmem:[%s217 + $0x18] sm:$0xff] %v2522
        %2539 = vst [vmem:[%s217 + $0x20] sm:$0xff] %v2523
        %2540 = vst [vmem:[%s217 + $0x28] sm:$0xff] %v2524
        %2541 = vst [vmem:[%s217 + $0x30] sm:$0xff] %v2525
        %2542 = vst [vmem:[%s217 + $0x38] sm:$0xff] %v2526
        %2543 = vst [vmem:[%s217 + $0x40] sm:$0xff] %v2527
        %2544 = vst [vmem:[%s217 + $0x48] sm:$0xff] %v2528
        %2545 = vst [vmem:[%s217 + $0x50] sm:$0xff] %v2529
        %2546 = vst [vmem:[%s217 + $0x58] sm:$0xff] %v2530
        %2547 = vst [vmem:[%s217 + $0x60] sm:$0xff] %v2531
        %2548 = vst [vmem:[%s217 + $0x68] sm:$0xff] %v2532
        %2549 = vst [vmem:[%s217 + $0x70] sm:$0xff] %v2533
        %2550 = vst [vmem:[%s217 + $0x78] sm:$0xff] %v2534
        %s2551 = sand.u32 %s137, 1
        %s2552 = scalar_lea.sflag [#allocation3], %s2551
        %s2553 = sand.u32 %s137, 1
        %s2554 = smul.addr %s2553, 128
        %s2555 = scalar_lea.vmem [#allocation2], %s2554
        // Predicated region
        $region41: #{tpu_custom_call.1} parent=39 // pred_check
          %p2556 = pneg %p147
        $region42: #{tpu_custom_call.1} parent=39 // pred_check_branch
          %2558 = sbr.rel (%p2556) target = $region44
        $region43: #{tpu_custom_call.1} parent=39 // pred_region
          %s2560 = ssub.s32 2048, 2048
          %2561 = vsyncadd %s2552, %s2560
          %s2562 = smul.addr %s19, 16
          %s2563 = smul.addr %s2562, 128
          %s2564 = scalar_lea.hbm %s5, %s2563
          %s2565 = sshll.u32 %s2555, 4
          %s2566 = int_to_ptr.vmem [resolvable:$true] %s2565
          %2571 = dma.vmem_to_hbm [thread:$0]  %s2566, 2048, %s2564, %s2552, 256, 256, 16
        $region44: #{tpu_custom_call.1} parent=39 // pred_fallthru
          _
      $region40: #{tpu_custom_call.1} parent=5 // pred_fallthru
        _
      %p2572 = scmp.le.s32.totalorder 2, %s14
      // Predicated region
      $region45: #{tpu_custom_call.1} parent=5 // pred_check
        %p2573 = pneg %p2572
      $region46: #{tpu_custom_call.1} parent=5 // pred_check_branch
        %2575 = sbr.rel (%p2573) target = $region48
      $region47: #{tpu_custom_call.1} parent=5 // pred_region
        %s2576 = ssub.s32 %s14, 2
        // Predicated region
        $region49: #{tpu_custom_call.1} parent=47 // pred_check
          %p2577 = pneg %p153
        $region50: #{tpu_custom_call.1} parent=47 // pred_check_branch
          %2579 = sbr.rel (%p2577) target = $region52
        $region51: #{tpu_custom_call.1} parent=47 // pred_region
          %s2580 = sand.u32 %s138, 1
          %s2581 = scalar_lea.sflag [#allocation3], %s2580
          %s2582 = sand.u32 %s138, 1
          %s2583 = smul.addr %s2582, 128
          %s2584 = scalar_lea.vmem [#allocation2], %s2583
          %2585 = dma.done %s2581, 2048
        $region52: #{tpu_custom_call.1} parent=47 // pred_fallthru
          _
      $region48: #{tpu_custom_call.1} parent=5 // pred_fallthru
        _
    $region6: #{tpu_custom_call.1} parent=1 // loop_footer
      %s18 = sadd.s32 1, %s14
    $region7: #{tpu_custom_call.1} parent=1 // loop_footer_branch
      %13 = sbr.rel target = $region3
    $region8: #{tpu_custom_call.1} parent=1 // loop_exit
      _
    %2586 = vsyncpa [#allocation3], 1
    %s2587 = scalar_lea.sflag [#allocation3], 1
    %2588 = vsyncpa %s2587, 1

</llo_original>
